<compile_context>
chip_gen: v7x
topology: tpu7x:2x2x1
jax: 0.10.0
libtpu: 0.0.40
codegen_flags: <defaults>
</compile_context>

<pallas_src>
import functools

import jax
import jax.numpy as jnp
from jax.experimental import pallas as pl
from jax.experimental.pallas import tpu as pltpu


def _round_up(x, m):
    return ((x + m - 1) // m) * m


# ------------------------------ Pallas kernels ------------------------------

def _mm_bias_stats_kernel(a_ref, b_ref, bias_ref, o_ref, stats_ref, *,
                          m_true, tm, mask_rows):
    """(tm,K)@(K,tn) bf16 MXU matmul + bias.  The f32 result is down-cast to a
    bf16 activation tile; per-(M-block, channel) partial sum / sum-of-squares
    (BatchNorm batch statistics) are emitted from the f32 values so the
    activation tensor is never re-read by a separate statistics pass."""
    y = jnp.dot(a_ref[...], b_ref[...],
                preferred_element_type=jnp.float32)          # f32 accumulation
    y = y + bias_ref[...]                                    # (1, tn) broadcast
    o_ref[...] = y.astype(o_ref.dtype)                       # bf16 activation

    if mask_rows:  # static: only when the row count had to be padded
        i = pl.program_id(0)
        row = i * tm + jax.lax.broadcasted_iota(jnp.int32, (tm, 1), 0)
        y = jnp.where(row < m_true, y, 0.0)
    s = jnp.sum(y, axis=0, keepdims=True)
    sq = jnp.sum(y * y, axis=0, keepdims=True)
    stats_ref[0:1, :] = s
    stats_ref[1:2, :] = sq
    stats_ref[2:8, :] = jnp.zeros((6, s.shape[1]), jnp.float32)


def _reduce_partial_stats(st, nmb):
    """st: (nmb*8, Np) partial stats; rows 8b / 8b+1 hold block b's sum/sumsq."""
    s, sq = st[0:1, :], st[1:2, :]
    for b in range(1, nmb):
        s = s + st[8 * b:8 * b + 1, :]
        sq = sq + st[8 * b + 1:8 * b + 2, :]
    return s, sq


def _bn_scale_shift(s, sq, gamma, beta, inv_n, eps):
    mean = s * inv_n
    var = jnp.maximum(sq * inv_n - mean * mean, 0.0)          # biased variance
    scale = gamma * jax.lax.rsqrt(var + eps)
    shift = beta - mean * scale
    return scale, shift


def _bn_act_kernel(stats_ref, g_ref, b_ref, y_ref, o_ref, *, nmb, inv_n, eps, relu):
    s, sq = _reduce_partial_stats(stats_ref[...], nmb)
    scale, shift = _bn_scale_shift(s, sq, g_ref[...], b_ref[...], inv_n, eps)
    y = y_ref[...].astype(jnp.float32) * scale + shift
    if relu:
        y = jnp.maximum(y, 0.0)
    o_ref[...] = y.astype(o_ref.dtype)


def _tail_bn_shortcut_kernel(st2_ref, g2_ref, b2_ref, sts_ref, gs_ref, bs_ref,
                             y2_ref, ys_ref, o_ref, *, nmb2, nmbs, inv_n, eps):
    """relu( relu(bn2(conv2)) + bn_s(conv_shortcut) ) in one fused pass."""
    s2, sq2 = _reduce_partial_stats(st2_ref[...], nmb2)
    sc2, sh2 = _bn_scale_shift(s2, sq2, g2_ref[...], b2_ref[...], inv_n, eps)
    ss, sqs = _reduce_partial_stats(sts_ref[...], nmbs)
    scs, shs = _bn_scale_shift(ss, sqs, gs_ref[...], bs_ref[...], inv_n, eps)
    main = jnp.maximum(y2_ref[...].astype(jnp.float32) * sc2 + sh2, 0.0)
    short = ys_ref[...].astype(jnp.float32) * scs + shs
    o_ref[...] = jnp.maximum(main + short, 0.0)


def _tail_id_shortcut_kernel(st2_ref, g2_ref, b2_ref, y2_ref, s_ref, o_ref,
                             *, nmb2, inv_n, eps):
    """relu( relu(bn2(conv2)) + identity_shortcut ) in one fused pass."""
    s2, sq2 = _reduce_partial_stats(st2_ref[...], nmb2)
    sc2, sh2 = _bn_scale_shift(s2, sq2, g2_ref[...], b2_ref[...], inv_n, eps)
    main = jnp.maximum(y2_ref[...].astype(jnp.float32) * sc2 + sh2, 0.0)
    o_ref[...] = jnp.maximum(main + s_ref[...].astype(jnp.float32), 0.0)


# ------------------------------ tiling helpers -------------------------------

# Conservative VMEM budget so double-buffered tiles fit the 32 MiB default
# scoped limit on every generation (v7x physical VMEM is only 64 MiB).
_VMEM_BUDGET = 24 * 1024 * 1024


def _pick_tm(M, Kp, tn):
    """Largest M tile that (a) divides M (no row-padding copy of the im2col
    matrix) and (b) keeps double-buffered A/B/y blocks inside the VMEM budget."""
    def fits(tm):
        est = 2 * 2 * (tm * Kp + Kp * tn + tm * tn) + (1 << 20)  # bf16 bufs
        return est <= _VMEM_BUDGET
    for cand in (512, 384, 256, 128, 64, 32, 16, 8):
        if M % cand == 0 and fits(cand):
            return cand, M                                   # no padding
    for cand in (512, 256, 128, 64, 32, 16, 8):              # fallback: pad rows
        if fits(cand):
            return cand, _round_up(M, cand)
    return 8, _round_up(M, 8)


def _pick_tn(Np):
    """256-wide N tiles for the 256-wide MXUs (v6e/v7x); 128 on v5-class."""
    try:
        kind = jax.devices()[0].device_kind.lower()
    except Exception:
        kind = ""
    if "v5" in kind:
        return 128
    return 256 if Np % 256 == 0 else 128


def _row_tile(Mp):
    """<=512-row tiles for mem-bound elementwise passes (keeps the BlockSpec
    pipeline alive and the per-block VMEM footprint small)."""
    for cand in (512, 256, 128, 64, 32, 16, 8):
        if Mp % cand == 0:
            return cand
    return Mp


# ------------------------------ Pallas wrappers -----------------------------

def conv_matmul_bias_stats(a, w_mat, bias_row, *, tn):
    """a: (M, Kp) bf16 im2col rows; w_mat: (Kp, Np) bf16; bias_row: (1, Np) f32.
    Returns (y (Mp, Np) bf16, stats (nmb*8, Np) f32 partial [sum; sumsq])."""
    M, Kp = a.shape
    Kp2, Np = w_mat.shape
    assert Kp == Kp2 and Np % 128 == 0 and Kp % 128 == 0 and Np % tn == 0
    tm, Mp = _pick_tm(M, Kp, tn)
    if Mp != M:
        a = jnp.pad(a, ((0, Mp - M), (0, 0)))
    nmb = Mp // tm
    # M-blocks outer (parallel -> megacore on v7x), N-blocks inner: the big
    # im2col operand is read exactly once; only the small weight re-streams.
    grid = (nmb, Np // tn)
    y, stats = pl.pallas_call(
        functools.partial(_mm_bias_stats_kernel, m_true=M, tm=tm,
                          mask_rows=(Mp != M)),
        out_shape=(jax.ShapeDtypeStruct((Mp, Np), jnp.bfloat16),
                   jax.ShapeDtypeStruct((nmb * 8, Np), jnp.float32)),
        grid=grid,
        in_specs=[pl.BlockSpec((tm, Kp), lambda i, j: (i, 0)),
                  pl.BlockSpec((Kp, tn), lambda i, j: (0, j)),
                  pl.BlockSpec((1, tn), lambda i, j: (0, j))],
        out_specs=(pl.BlockSpec((tm, tn), lambda i, j: (i, j)),
                   pl.BlockSpec((8, tn), lambda i, j: (i, j))),
        compiler_params=pltpu.CompilerParams(
            dimension_semantics=("parallel", "arbitrary")),
    )(a, w_mat, bias_row)
    return y, stats


def bn_act(stats, gamma_row, beta_row, y, *, m_true, relu=True,
           out_dtype=jnp.bfloat16, eps=1e-5):
    Mp, Np = y.shape
    nmb = stats.shape[0] // 8
    tr = _row_tile(Mp)
    return pl.pallas_call(
        functools.partial(_bn_act_kernel, nmb=nmb, inv_n=1.0 / m_true,
                          eps=eps, relu=relu),
        out_shape=jax.ShapeDtypeStruct((Mp, Np), out_dtype),
        grid=(Mp // tr,),
        in_specs=[pl.BlockSpec((nmb * 8, Np), lambda r: (0, 0)),
                  pl.BlockSpec((1, Np), lambda r: (0, 0)),
                  pl.BlockSpec((1, Np), lambda r: (0, 0)),
                  pl.BlockSpec((tr, Np), lambda r: (r, 0))],
        out_specs=pl.BlockSpec((tr, Np), lambda r: (r, 0)),
        compiler_params=pltpu.CompilerParams(dimension_semantics=("parallel",)),
    )(stats, gamma_row, beta_row, y)


def tail_bn_shortcut(st2, g2, b2, sts, gs, bs, y2, ys, *, m_true, eps=1e-5):
    Mp, Np = y2.shape
    nmb2, nmbs = st2.shape[0] // 8, sts.shape[0] // 8
    tr = _row_tile(Mp)
    return pl.pallas_call(
        functools.partial(_tail_bn_shortcut_kernel, nmb2=nmb2, nmbs=nmbs,
                          inv_n=1.0 / m_true, eps=eps),
        out_shape=jax.ShapeDtypeStruct((Mp, Np), jnp.float32),
        grid=(Mp // tr,),
        in_specs=[pl.BlockSpec((nmb2 * 8, Np), lambda r: (0, 0)),
                  pl.BlockSpec((1, Np), lambda r: (0, 0)),
                  pl.BlockSpec((1, Np), lambda r: (0, 0)),
                  pl.BlockSpec((nmbs * 8, Np), lambda r: (0, 0)),
                  pl.BlockSpec((1, Np), lambda r: (0, 0)),
                  pl.BlockSpec((1, Np), lambda r: (0, 0)),
                  pl.BlockSpec((tr, Np), lambda r: (r, 0)),
                  pl.BlockSpec((tr, Np), lambda r: (r, 0))],
        out_specs=pl.BlockSpec((tr, Np), lambda r: (r, 0)),
        compiler_params=pltpu.CompilerParams(dimension_semantics=("parallel",)),
    )(st2, g2, b2, sts, gs, bs, y2, ys)


def tail_id_shortcut(st2, g2, b2, y2, s_rows, *, m_true, eps=1e-5):
    Mp, Np = y2.shape
    nmb2 = st2.shape[0] // 8
    tr = _row_tile(Mp)
    return pl.pallas_call(
        functools.partial(_tail_id_shortcut_kernel, nmb2=nmb2,
                          inv_n=1.0 / m_true, eps=eps),
        out_shape=jax.ShapeDtypeStruct((Mp, Np), jnp.float32),
        grid=(Mp // tr,),
        in_specs=[pl.BlockSpec((nmb2 * 8, Np), lambda r: (0, 0)),
                  pl.BlockSpec((1, Np), lambda r: (0, 0)),
                  pl.BlockSpec((1, Np), lambda r: (0, 0)),
                  pl.BlockSpec((tr, Np), lambda r: (r, 0)),
                  pl.BlockSpec((tr, Np), lambda r: (r, 0))],
        out_specs=pl.BlockSpec((tr, Np), lambda r: (r, 0)),
        compiler_params=pltpu.CompilerParams(dimension_semantics=("parallel",)),
    )(st2, g2, b2, y2, s_rows)


# ------------------------------- XLA glue -----------------------------------

def _im2col(x_nhwc, k, stride, pad, kp):
    """(N*Ho*Wo, kp) im2col rows with the K axis zero-padded to `kp` in the
    same concatenate (single materialization, no later re-pad copy)."""
    # TODO(synk): for large feature maps, replace materialized im2col with a
    # 9-tap shifted-BlockSpec accumulation to avoid the 9x HBM expansion.
    N, H, W, C = x_nhwc.shape
    xp = jnp.pad(x_nhwc, ((0, 0), (pad, pad), (pad, pad), (0, 0))) if pad else x_nhwc
    Ho = (H + 2 * pad - k) // stride + 1
    Wo = (W + 2 * pad - k) // stride + 1
    cols = [xp[:, kh:kh + (Ho - 1) * stride + 1:stride,
               kw:kw + (Wo - 1) * stride + 1:stride, :]
            for kh in range(k) for kw in range(k)]
    kk = k * k * C
    if kp > kk:
        cols.append(jnp.zeros((N, Ho, Wo, kp - kk), x_nhwc.dtype))
    patches = jnp.concatenate(cols, axis=-1)
    return patches.reshape(N * Ho * Wo, kp), Ho, Wo


def _conv_w_to_mat(w, kp, np_):
    """torch Conv2d weight (Co,Ci,kh,kw) -> pre-padded (kp, np_) bf16 matrix."""
    Co, Ci, kh, kw = w.shape
    m = jnp.transpose(w, (2, 3, 1, 0)).reshape(kh * kw * Ci, Co)
    return (jnp.zeros((kp, np_), jnp.float32).at[:kh * kw * Ci, :Co].set(m)
            ).astype(jnp.bfloat16)


def _row_pad(v, np_):
    # NOTE: padded gamma columns stay zero -> scale=0 keeps padded lanes at 0.
    return jnp.zeros((1, np_), jnp.float32).at[0, :v.shape[0]].set(v.astype(jnp.float32))


# ------------------------------- parameters ---------------------------------

def init_raw_params(key, in_ch, out_ch, downsample):
    """Random Conv weights/biases; default BN affine (gamma=1, beta=0) —
    training-mode, freshly-constructed PyTorch ResBlock."""
    ks = jax.random.split(key, 6)

    def conv_w(k, co, ci, ksz):
        return jax.random.normal(k, (co, ci, ksz, ksz), jnp.float32) / jnp.sqrt(ci * ksz * ksz)

    raw = {
        "w1": conv_w(ks[0], out_ch, in_ch, 3),
        "b1": 0.1 * jax.random.normal(ks[1], (out_ch,), jnp.float32),
        "w2": conv_w(ks[2], out_ch, out_ch, 3),
        "b2": 0.1 * jax.random.normal(ks[3], (out_ch,), jnp.float32),
        "g1": jnp.ones((out_ch,), jnp.float32), "beta1": jnp.zeros((out_ch,), jnp.float32),
        "g2": jnp.ones((out_ch,), jnp.float32), "beta2": jnp.zeros((out_ch,), jnp.float32),
    }
    if downsample:
        raw["ws"] = conv_w(ks[4], out_ch, in_ch, 1)
        raw["bs"] = 0.1 * jax.random.normal(ks[5], (out_ch,), jnp.float32)
        raw["gs"] = jnp.ones((out_ch,), jnp.float32)
        raw["betas"] = jnp.zeros((out_ch,), jnp.float32)
    return raw


def prep_params(raw, downsample):
    """One-time weight re-layout / padding / bf16 cast (no per-call re-pads)."""
    out_ch, in_ch = raw["w1"].shape[0], raw["w1"].shape[1]
    np_ = _round_up(out_ch, 128)
    kp1 = _round_up(9 * in_ch, 128)
    kp2 = _round_up(9 * out_ch, 128)
    pp = {
        "w1": _conv_w_to_mat(raw["w1"], kp1, np_), "b1": _row_pad(raw["b1"], np_),
        "w2": _conv_w_to_mat(raw["w2"], kp2, np_), "b2": _row_pad(raw["b2"], np_),
        "g1": _row_pad(raw["g1"], np_), "beta1": _row_pad(raw["beta1"], np_),
        "g2": _row_pad(raw["g2"], np_), "beta2": _row_pad(raw["beta2"], np_),
    }
    if downsample:
        kps = _round_up(in_ch, 128)
        pp["ws"] = _conv_w_to_mat(raw["ws"], kps, np_)
        pp["bs"] = _row_pad(raw["bs"], np_)
        pp["gs"] = _row_pad(raw["gs"], np_)
        pp["betas"] = _row_pad(raw["betas"], np_)
    return pp


# --------------------------------- forward ----------------------------------

def resblock_forward(pp, x_nchw, *, out_ch, downsample):
    """ResBlock forward, training-mode BatchNorm (batch statistics)."""
    N, Ci, H, W = x_nchw.shape
    Np = pp["w1"].shape[1]
    kp1, kp2 = pp["w1"].shape[0], pp["w2"].shape[0]
    tn = _pick_tn(Np)

    x_nhwc = jnp.transpose(x_nchw, (0, 2, 3, 1))
    x_bf = x_nhwc.astype(jnp.bfloat16)                       # bf16 MXU operands

    s1 = 2 if downsample else 1
    # conv1 (3x3, stride s1, pad 1) + bias, BN partial stats fused in epilogue
    a1, Ho, Wo = _im2col(x_bf, 3, s1, 1, kp1)
    M = N * Ho * Wo
    y1, st1 = conv_matmul_bias_stats(a1, pp["w1"], pp["b1"], tn=tn)
    # bn1 + ReLU, emitted directly as bf16 (operand of conv2's im2col)
    h_rows = bn_act(st1, pp["g1"], pp["beta1"], y1, m_true=M,
                    relu=True, out_dtype=jnp.bfloat16)
    h_nhwc = h_rows[:M, :out_ch].reshape(N, Ho, Wo, out_ch)

    # conv2 (3x3, stride 1, pad 1) + bias + fused BN partial stats
    a2, _, _ = _im2col(h_nhwc, 3, 1, 1, kp2)
    y2, st2 = conv_matmul_bias_stats(a2, pp["w2"], pp["b2"], tn=tn)

    if downsample:
        # shortcut: 1x1 conv, stride 2 + bias + fused BN partial stats
        a_s, _, _ = _im2col(x_bf, 1, 2, 0, pp["ws"].shape[0])
        ys, sts = conv_matmul_bias_stats(a_s, pp["ws"], pp["bs"], tn=tn)
        assert ys.shape == y2.shape
        out_rows = tail_bn_shortcut(st2, pp["g2"], pp["beta2"],
                                    sts, pp["gs"], pp["betas"],
                                    y2, ys, m_true=M)
    else:
        assert Ci == out_ch, "identity shortcut requires in_channels == out_channels"
        Mp = y2.shape[0]
        # bf16 lane-padded identity-shortcut rows (row view of x_nhwc is free;
        # only the lane pad is an XLA copy, at half the previous f32 traffic).
        s_rows = jnp.zeros((Mp, Np), jnp.bfloat16).at[:M, :Ci].set(
            x_bf.reshape(M, Ci))
        out_rows = tail_id_shortcut(st2, pp["g2"], pp["beta2"], y2, s_rows, m_true=M)

    out = out_rows[:M, :out_ch].reshape(N, Ho, Wo, out_ch)
    return jnp.transpose(out, (0, 3, 1, 2))                  # NCHW


# ------------------------- pure-JAX reference (check) ------------------------

def _ref_conv(x, w, b, stride, pad):
    y = jax.lax.conv_general_dilated(
        x.astype(jnp.bfloat16), w.astype(jnp.bfloat16),
        window_strides=(stride, stride), padding=((pad, pad), (pad, pad)),
        dimension_numbers=("NCHW", "OIHW", "NCHW"),
        preferred_element_type=jnp.float32)
    return y + b[None, :, None, None]


def _ref_bn(y, g, b, eps=1e-5):
    mean = jnp.mean(y, axis=(0, 2, 3), keepdims=True)
    var = jnp.mean((y - mean) ** 2, axis=(0, 2, 3), keepdims=True)
    return (y - mean) * jax.lax.rsqrt(var + eps) * g[None, :, None, None] \
        + b[None, :, None, None]


def resblock_ref(raw, x, downsample):
    if downsample:
        sc = _ref_bn(_ref_conv(x, raw["ws"], raw["bs"], 2, 0), raw["gs"], raw["betas"])
        s1 = 2
    else:
        sc = x
        s1 = 1
    h = jax.nn.relu(_ref_bn(_ref_conv(x, raw["w1"], raw["b1"], s1, 1),
                            raw["g1"], raw["beta1"]))
    h = jax.nn.relu(_ref_bn(_ref_conv(h, raw["w2"], raw["b2"], 1, 1),
                            raw["g2"], raw["beta2"]))
    return jax.nn.relu(h + sc)


# ----------------------------------- main ------------------------------------

if __name__ == "__main__":
    key = jax.random.PRNGKey(0)
    k1, k2, k3, k4 = jax.random.split(key, 4)

    # bf16 activations throughout -> slightly looser tolerance than pure f32.
    TOL = 3e-2

    # --- case 1: downsample=True (conv shortcut), 16 -> 32 channels, 16x16 ---
    in_ch, out_ch, H, B = 16, 32, 16, 2
    raw = init_raw_params(k1, in_ch, out_ch, downsample=True)
    pp = prep_params(raw, downsample=True)
    x = jax.random.normal(k2, (B, in_ch, H, H), jnp.float32)

    fwd = jax.jit(functools.partial(resblock_forward, pp,
                                    out_ch=out_ch, downsample=True))
    out = fwd(x)
    jax.block_until_ready(out)
    assert out.shape == (B, out_ch, H // 2, H // 2)
    ref = resblock_ref(raw, x, True)
    err = float(jnp.max(jnp.abs(out - ref)))
    assert err < TOL, f"downsample=True mismatch, max err {err}"

    # --- case 2: downsample=False (identity shortcut), 32 -> 32, 16x16 ------
    raw2 = init_raw_params(k3, out_ch, out_ch, downsample=False)
    pp2 = prep_params(raw2, downsample=False)
    x2 = jax.random.normal(k4, (B, out_ch, H, H), jnp.float32)
    fwd2 = jax.jit(functools.partial(resblock_forward, pp2,
                                     out_ch=out_ch, downsample=False))
    out2 = fwd2(x2)
    jax.block_until_ready(out2)
    assert out2.shape == (B, out_ch, H, H)
    ref2 = resblock_ref(raw2, x2, False)
    err2 = float(jnp.max(jnp.abs(out2 - ref2)))
    assert err2 < TOL, f"downsample=False mismatch, max err {err2}"

    print("KERNEL_OK")
</pallas_src>

<mosaic_0001>
module attributes {stable_mosaic.version = 11 : i64} {
  func.func @_mm_bias_stats_kernel(%arg0: i32, %arg1: i32, %arg2: memref<128x256xbf16, #tpu.memory_space<vmem>>, %arg3: memref<256x128xbf16, #tpu.memory_space<vmem>>, %arg4: memref<1x128xf32, #tpu.memory_space<vmem>>, %arg5: memref<128x128xbf16, #tpu.memory_space<vmem>>, %arg6: memref<8x128xf32, #tpu.memory_space<vmem>>) attributes {dimension_semantics = [#tpu.dimension_semantics<parallel>, #tpu.dimension_semantics<arbitrary>], iteration_bounds = array<i64: 1, 1>, scalar_prefetch = 0 : i64, scratch_operands = 0 : i64, tpu.core_type = #tpu.core_type<tc>, window_params = [{transform_indices = @transform_0, window_bounds = array<i64: 128, 256>}, {transform_indices = @transform_1, window_bounds = array<i64: 256, 128>}, {transform_indices = @transform_2, window_bounds = array<i64: 1, 128>}, {transform_indices = @transform_3, window_bounds = array<i64: 128, 128>}, {transform_indices = @transform_4, window_bounds = array<i64: 8, 128>}]} {
    %c0 = arith.constant 0 : index
    %c0_0 = arith.constant 0 : index
    %0 = vector.load %arg2[%c0, %c0_0] : memref<128x256xbf16, #tpu.memory_space<vmem>>, vector<128x256xbf16>
    %c0_1 = arith.constant 0 : index
    %c0_2 = arith.constant 0 : index
    %1 = vector.load %arg3[%c0_1, %c0_2] : memref<256x128xbf16, #tpu.memory_space<vmem>>, vector<256x128xbf16>
    %cst = arith.constant dense<0.000000e+00> : vector<128x128xf32>
    %2 = tpu.matmul %0, %1, %cst {dimension_numbers = #tpu.dot_dimension_numbers<[1], [0], [0], [1], [0, 0, 1, 1], [], []>} : vector<128x256xbf16>, vector<256x128xbf16>, vector<128x128xf32> -> vector<128x128xf32>
    %c0_3 = arith.constant 0 : index
    %c0_4 = arith.constant 0 : index
    %3 = vector.load %arg4[%c0_3, %c0_4] : memref<1x128xf32, #tpu.memory_space<vmem>>, vector<1x128xf32>
    %4 = vector.broadcast %3 : vector<1x128xf32> to vector<128x128xf32>
    %5 = arith.addf %2, %4 : vector<128x128xf32>
    %6 = arith.truncf %5 : vector<128x128xf32> to vector<128x128xbf16>
    %c0_5 = arith.constant 0 : index
    %c0_6 = arith.constant 0 : index
    %7 = vector.load %arg5[%c0_5, %c0_6] : memref<128x128xbf16, #tpu.memory_space<vmem>>, vector<128x128xbf16>
    tpu.vector_store %arg5[%c0_5, %c0_6], %6 {strides = array<i32>} : memref<128x128xbf16, #tpu.memory_space<vmem>>, vector<128x128xbf16>,
    %cst_7 = arith.constant dense<0.000000e+00> : vector<128xf32>
    %8 = vector.multi_reduction <add>, %5, %cst_7 [0] : vector<128x128xf32> to vector<128xf32>
    %9 = vector.shape_cast %8 : vector<128xf32> to vector<1x128xf32>
    %10 = arith.mulf %5, %5 : vector<128x128xf32>
    %cst_8 = arith.constant dense<0.000000e+00> : vector<128xf32>
    %11 = vector.multi_reduction <add>, %10, %cst_8 [0] : vector<128x128xf32> to vector<128xf32>
    %12 = vector.shape_cast %11 : vector<128xf32> to vector<1x128xf32>
    %c0_9 = arith.constant 0 : index
    %c0_10 = arith.constant 0 : index
    %13 = vector.load %arg6[%c0_9, %c0_10] : memref<8x128xf32, #tpu.memory_space<vmem>>, vector<1x128xf32>
    tpu.vector_store %arg6[%c0_9, %c0_10], %9 {strides = array<i32>} : memref<8x128xf32, #tpu.memory_space<vmem>>, vector<1x128xf32>,
    %c1 = arith.constant 1 : index
    %c0_11 = arith.constant 0 : index
    %14 = vector.load %arg6[%c1, %c0_11] : memref<8x128xf32, #tpu.memory_space<vmem>>, vector<1x128xf32>
    tpu.vector_store %arg6[%c1, %c0_11], %12 {strides = array<i32>} : memref<8x128xf32, #tpu.memory_space<vmem>>, vector<1x128xf32>,
    %cst_12 = arith.constant 0.000000e+00 : f32
    %15 = vector.broadcast %cst_12 : f32 to vector<6x128xf32>
    %c2 = arith.constant 2 : index
    %c0_13 = arith.constant 0 : index
    %16 = vector.load %arg6[%c2, %c0_13] : memref<8x128xf32, #tpu.memory_space<vmem>>, vector<6x128xf32>
    tpu.vector_store %arg6[%c2, %c0_13], %15 {strides = array<i32>} : memref<8x128xf32, #tpu.memory_space<vmem>>, vector<6x128xf32>,
    return
  }
  func.func @transform_0(%arg0: i32, %arg1: i32) -> (i32, i32) {
    %c0_i32 = arith.constant 0 : i32
    %c0_i32_0 = arith.constant 0 : i32
    return %arg0, %c0_i32 : i32, i32
  }
  func.func @transform_1(%arg0: i32, %arg1: i32) -> (i32, i32) {
    %c0_i32 = arith.constant 0 : i32
    %c0_i32_0 = arith.constant 0 : i32
    return %c0_i32, %arg1 : i32, i32
  }
  func.func @transform_2(%arg0: i32, %arg1: i32) -> (i32, i32) {
    %c0_i32 = arith.constant 0 : i32
    %c0_i32_0 = arith.constant 0 : i32
    return %c0_i32, %arg1 : i32, i32
  }
  func.func @transform_3(%arg0: i32, %arg1: i32) -> (i32, i32) {
    %c0_i32 = arith.constant 0 : i32
    return %arg0, %arg1 : i32, i32
  }
  func.func @transform_4(%arg0: i32, %arg1: i32) -> (i32, i32) {
    %c0_i32 = arith.constant 0 : i32
    return %arg0, %arg1 : i32, i32
  }
}

module attributes {stable_mosaic.version = 11 : i64} {
  func.func @_bn_act_kernel(%arg0: i32, %arg1: memref<8x128xf32, #tpu.memory_space<vmem>>, %arg2: memref<1x128xf32, #tpu.memory_space<vmem>>, %arg3: memref<1x128xf32, #tpu.memory_space<vmem>>, %arg4: memref<128x128xbf16, #tpu.memory_space<vmem>>, %arg5: memref<128x128xbf16, #tpu.memory_space<vmem>>) attributes {dimension_semantics = [#tpu.dimension_semantics<parallel>], iteration_bounds = array<i64: 1>, scalar_prefetch = 0 : i64, scratch_operands = 0 : i64, tpu.core_type = #tpu.core_type<tc>, window_params = [{pipeline_mode = #tpu.pipeline_mode<synchronous>, transform_indices = @transform_0, window_bounds = array<i64: 8, 128>}, {pipeline_mode = #tpu.pipeline_mode<synchronous>, transform_indices = @transform_1, window_bounds = array<i64: 1, 128>}, {pipeline_mode = #tpu.pipeline_mode<synchronous>, transform_indices = @transform_2, window_bounds = array<i64: 1, 128>}, {transform_indices = @transform_3, window_bounds = array<i64: 128, 128>}, {transform_indices = @transform_4, window_bounds = array<i64: 128, 128>}]} {
    %c0 = arith.constant 0 : index
    %c0_0 = arith.constant 0 : index
    %0 = vector.load %arg1[%c0, %c0_0] : memref<8x128xf32, #tpu.memory_space<vmem>>, vector<8x128xf32>
    %1 = vector.extract_strided_slice %0 {offsets = [0, 0], sizes = [1, 128], strides = [1, 1]} : vector<8x128xf32> to vector<1x128xf32>
    %2 = vector.extract_strided_slice %0 {offsets = [1, 0], sizes = [1, 128], strides = [1, 1]} : vector<8x128xf32> to vector<1x128xf32>
    %c0_1 = arith.constant 0 : index
    %c0_2 = arith.constant 0 : index
    %3 = vector.load %arg2[%c0_1, %c0_2] : memref<1x128xf32, #tpu.memory_space<vmem>>, vector<1x128xf32>
    %c0_3 = arith.constant 0 : index
    %c0_4 = arith.constant 0 : index
    %4 = vector.load %arg3[%c0_3, %c0_4] : memref<1x128xf32, #tpu.memory_space<vmem>>, vector<1x128xf32>
    %cst = arith.constant 7.812500e-03 : f32
    %5 = vector.broadcast %cst : f32 to vector<1x128xf32>
    %6 = arith.mulf %1, %5 : vector<1x128xf32>
    %cst_5 = arith.constant 7.812500e-03 : f32
    %7 = vector.broadcast %cst_5 : f32 to vector<1x128xf32>
    %8 = arith.mulf %2, %7 : vector<1x128xf32>
    %9 = arith.mulf %6, %6 : vector<1x128xf32>
    %10 = arith.subf %8, %9 : vector<1x128xf32>
    %cst_6 = arith.constant 0.000000e+00 : f32
    %11 = vector.broadcast %cst_6 : f32 to vector<1x128xf32>
    %12 = arith.maximumf %10, %11 : vector<1x128xf32>
    %cst_7 = arith.constant 9.99999974E-6 : f32
    %13 = vector.broadcast %cst_7 : f32 to vector<1x128xf32>
    %14 = arith.addf %12, %13 : vector<1x128xf32>
    %15 = math.rsqrt %14 : vector<1x128xf32>
    %16 = arith.mulf %3, %15 : vector<1x128xf32>
    %17 = arith.mulf %6, %16 : vector<1x128xf32>
    %18 = arith.subf %4, %17 : vector<1x128xf32>
    %c0_8 = arith.constant 0 : index
    %c0_9 = arith.constant 0 : index
    %19 = vector.load %arg4[%c0_8, %c0_9] : memref<128x128xbf16, #tpu.memory_space<vmem>>, vector<128x128xbf16>
    %20 = arith.extf %19 : vector<128x128xbf16> to vector<128x128xf32>
    %21 = vector.broadcast %16 : vector<1x128xf32> to vector<128x128xf32>
    %22 = arith.mulf %20, %21 : vector<128x128xf32>
    %23 = vector.broadcast %18 : vector<1x128xf32> to vector<128x128xf32>
    %24 = arith.addf %22, %23 : vector<128x128xf32>
    %cst_10 = arith.constant 0.000000e+00 : f32
    %25 = vector.broadcast %cst_10 : f32 to vector<128x128xf32>
    %26 = arith.maximumf %24, %25 : vector<128x128xf32>
    %27 = arith.truncf %26 : vector<128x128xf32> to vector<128x128xbf16>
    %c0_11 = arith.constant 0 : index
    %c0_12 = arith.constant 0 : index
    %28 = vector.load %arg5[%c0_11, %c0_12] : memref<128x128xbf16, #tpu.memory_space<vmem>>, vector<128x128xbf16>
    tpu.vector_store %arg5[%c0_11, %c0_12], %27 {strides = array<i32>} : memref<128x128xbf16, #tpu.memory_space<vmem>>, vector<128x128xbf16>,
    return
  }
  func.func @transform_0(%arg0: i32) -> (i32, i32) {
    %c0_i32 = arith.constant 0 : i32
    %c0_i32_0 = arith.constant 0 : i32
    %c0_i32_1 = arith.constant 0 : i32
    return %c0_i32, %c0_i32_0 : i32, i32
  }
  func.func @transform_1(%arg0: i32) -> (i32, i32) {
    %c0_i32 = arith.constant 0 : i32
    %c0_i32_0 = arith.constant 0 : i32
    %c0_i32_1 = arith.constant 0 : i32
    return %c0_i32, %c0_i32_0 : i32, i32
  }
  func.func @transform_2(%arg0: i32) -> (i32, i32) {
    %c0_i32 = arith.constant 0 : i32
    %c0_i32_0 = arith.constant 0 : i32
    %c0_i32_1 = arith.constant 0 : i32
    return %c0_i32, %c0_i32_0 : i32, i32
  }
  func.func @transform_3(%arg0: i32) -> (i32, i32) {
    %c0_i32 = arith.constant 0 : i32
    %c0_i32_0 = arith.constant 0 : i32
    return %arg0, %c0_i32 : i32, i32
  }
  func.func @transform_4(%arg0: i32) -> (i32, i32) {
    %c0_i32 = arith.constant 0 : i32
    %c0_i32_0 = arith.constant 0 : i32
    return %arg0, %c0_i32 : i32, i32
  }
}

module attributes {stable_mosaic.version = 11 : i64} {
  func.func @_mm_bias_stats_kernel(%arg0: i32, %arg1: i32, %arg2: memref<128x384xbf16, #tpu.memory_space<vmem>>, %arg3: memref<384x128xbf16, #tpu.memory_space<vmem>>, %arg4: memref<1x128xf32, #tpu.memory_space<vmem>>, %arg5: memref<128x128xbf16, #tpu.memory_space<vmem>>, %arg6: memref<8x128xf32, #tpu.memory_space<vmem>>) attributes {dimension_semantics = [#tpu.dimension_semantics<parallel>, #tpu.dimension_semantics<arbitrary>], iteration_bounds = array<i64: 1, 1>, scalar_prefetch = 0 : i64, scratch_operands = 0 : i64, tpu.core_type = #tpu.core_type<tc>, window_params = [{transform_indices = @transform_0, window_bounds = array<i64: 128, 384>}, {transform_indices = @transform_1, window_bounds = array<i64: 384, 128>}, {transform_indices = @transform_2, window_bounds = array<i64: 1, 128>}, {transform_indices = @transform_3, window_bounds = array<i64: 128, 128>}, {transform_indices = @transform_4, window_bounds = array<i64: 8, 128>}]} {
    %c0 = arith.constant 0 : index
    %c0_0 = arith.constant 0 : index
    %0 = vector.load %arg2[%c0, %c0_0] : memref<128x384xbf16, #tpu.memory_space<vmem>>, vector<128x384xbf16>
    %c0_1 = arith.constant 0 : index
    %c0_2 = arith.constant 0 : index
    %1 = vector.load %arg3[%c0_1, %c0_2] : memref<384x128xbf16, #tpu.memory_space<vmem>>, vector<384x128xbf16>
    %cst = arith.constant dense<0.000000e+00> : vector<128x128xf32>
    %2 = tpu.matmul %0, %1, %cst {dimension_numbers = #tpu.dot_dimension_numbers<[1], [0], [0], [1], [0, 0, 1, 1], [], []>} : vector<128x384xbf16>, vector<384x128xbf16>, vector<128x128xf32> -> vector<128x128xf32>
    %c0_3 = arith.constant 0 : index
    %c0_4 = arith.constant 0 : index
    %3 = vector.load %arg4[%c0_3, %c0_4] : memref<1x128xf32, #tpu.memory_space<vmem>>, vector<1x128xf32>
    %4 = vector.broadcast %3 : vector<1x128xf32> to vector<128x128xf32>
    %5 = arith.addf %2, %4 : vector<128x128xf32>
    %6 = arith.truncf %5 : vector<128x128xf32> to vector<128x128xbf16>
    %c0_5 = arith.constant 0 : index
    %c0_6 = arith.constant 0 : index
    %7 = vector.load %arg5[%c0_5, %c0_6] : memref<128x128xbf16, #tpu.memory_space<vmem>>, vector<128x128xbf16>
    tpu.vector_store %arg5[%c0_5, %c0_6], %6 {strides = array<i32>} : memref<128x128xbf16, #tpu.memory_space<vmem>>, vector<128x128xbf16>,
    %cst_7 = arith.constant dense<0.000000e+00> : vector<128xf32>
    %8 = vector.multi_reduction <add>, %5, %cst_7 [0] : vector<128x128xf32> to vector<128xf32>
    %9 = vector.shape_cast %8 : vector<128xf32> to vector<1x128xf32>
    %10 = arith.mulf %5, %5 : vector<128x128xf32>
    %cst_8 = arith.constant dense<0.000000e+00> : vector<128xf32>
    %11 = vector.multi_reduction <add>, %10, %cst_8 [0] : vector<128x128xf32> to vector<128xf32>
    %12 = vector.shape_cast %11 : vector<128xf32> to vector<1x128xf32>
    %c0_9 = arith.constant 0 : index
    %c0_10 = arith.constant 0 : index
    %13 = vector.load %arg6[%c0_9, %c0_10] : memref<8x128xf32, #tpu.memory_space<vmem>>, vector<1x128xf32>
    tpu.vector_store %arg6[%c0_9, %c0_10], %9 {strides = array<i32>} : memref<8x128xf32, #tpu.memory_space<vmem>>, vector<1x128xf32>,
    %c1 = arith.constant 1 : index
    %c0_11 = arith.constant 0 : index
    %14 = vector.load %arg6[%c1, %c0_11] : memref<8x128xf32, #tpu.memory_space<vmem>>, vector<1x128xf32>
    tpu.vector_store %arg6[%c1, %c0_11], %12 {strides = array<i32>} : memref<8x128xf32, #tpu.memory_space<vmem>>, vector<1x128xf32>,
    %cst_12 = arith.constant 0.000000e+00 : f32
    %15 = vector.broadcast %cst_12 : f32 to vector<6x128xf32>
    %c2 = arith.constant 2 : index
    %c0_13 = arith.constant 0 : index
    %16 = vector.load %arg6[%c2, %c0_13] : memref<8x128xf32, #tpu.memory_space<vmem>>, vector<6x128xf32>
    tpu.vector_store %arg6[%c2, %c0_13], %15 {strides = array<i32>} : memref<8x128xf32, #tpu.memory_space<vmem>>, vector<6x128xf32>,
    return
  }
  func.func @transform_0(%arg0: i32, %arg1: i32) -> (i32, i32) {
    %c0_i32 = arith.constant 0 : i32
    %c0_i32_0 = arith.constant 0 : i32
    return %arg0, %c0_i32 : i32, i32
  }
  func.func @transform_1(%arg0: i32, %arg1: i32) -> (i32, i32) {
    %c0_i32 = arith.constant 0 : i32
    %c0_i32_0 = arith.constant 0 : i32
    return %c0_i32, %arg1 : i32, i32
  }
  func.func @transform_2(%arg0: i32, %arg1: i32) -> (i32, i32) {
    %c0_i32 = arith.constant 0 : i32
    %c0_i32_0 = arith.constant 0 : i32
    return %c0_i32, %arg1 : i32, i32
  }
  func.func @transform_3(%arg0: i32, %arg1: i32) -> (i32, i32) {
    %c0_i32 = arith.constant 0 : i32
    return %arg0, %arg1 : i32, i32
  }
  func.func @transform_4(%arg0: i32, %arg1: i32) -> (i32, i32) {
    %c0_i32 = arith.constant 0 : i32
    return %arg0, %arg1 : i32, i32
  }
}

module attributes {stable_mosaic.version = 11 : i64} {
  func.func @_mm_bias_stats_kernel(%arg0: i32, %arg1: i32, %arg2: memref<128x128xbf16, #tpu.memory_space<vmem>>, %arg3: memref<128x128xbf16, #tpu.memory_space<vmem>>, %arg4: memref<1x128xf32, #tpu.memory_space<vmem>>, %arg5: memref<128x128xbf16, #tpu.memory_space<vmem>>, %arg6: memref<8x128xf32, #tpu.memory_space<vmem>>) attributes {dimension_semantics = [#tpu.dimension_semantics<parallel>, #tpu.dimension_semantics<arbitrary>], iteration_bounds = array<i64: 1, 1>, scalar_prefetch = 0 : i64, scratch_operands = 0 : i64, tpu.core_type = #tpu.core_type<tc>, window_params = [{transform_indices = @transform_0, window_bounds = array<i64: 128, 128>}, {transform_indices = @transform_1, window_bounds = array<i64: 128, 128>}, {transform_indices = @transform_2, window_bounds = array<i64: 1, 128>}, {transform_indices = @transform_3, window_bounds = array<i64: 128, 128>}, {transform_indices = @transform_4, window_bounds = array<i64: 8, 128>}]} {
    %c0 = arith.constant 0 : index
    %c0_0 = arith.constant 0 : index
    %0 = vector.load %arg2[%c0, %c0_0] : memref<128x128xbf16, #tpu.memory_space<vmem>>, vector<128x128xbf16>
    %c0_1 = arith.constant 0 : index
    %c0_2 = arith.constant 0 : index
    %1 = vector.load %arg3[%c0_1, %c0_2] : memref<128x128xbf16, #tpu.memory_space<vmem>>, vector<128x128xbf16>
    %cst = arith.constant dense<0.000000e+00> : vector<128x128xf32>
    %2 = tpu.matmul %0, %1, %cst {dimension_numbers = #tpu.dot_dimension_numbers<[1], [0], [0], [1], [0, 0, 1, 1], [], []>} : vector<128x128xbf16>, vector<128x128xbf16>, vector<128x128xf32> -> vector<128x128xf32>
    %c0_3 = arith.constant 0 : index
    %c0_4 = arith.constant 0 : index
    %3 = vector.load %arg4[%c0_3, %c0_4] : memref<1x128xf32, #tpu.memory_space<vmem>>, vector<1x128xf32>
    %4 = vector.broadcast %3 : vector<1x128xf32> to vector<128x128xf32>
    %5 = arith.addf %2, %4 : vector<128x128xf32>
    %6 = arith.truncf %5 : vector<128x128xf32> to vector<128x128xbf16>
    %c0_5 = arith.constant 0 : index
    %c0_6 = arith.constant 0 : index
    %7 = vector.load %arg5[%c0_5, %c0_6] : memref<128x128xbf16, #tpu.memory_space<vmem>>, vector<128x128xbf16>
    tpu.vector_store %arg5[%c0_5, %c0_6], %6 {strides = array<i32>} : memref<128x128xbf16, #tpu.memory_space<vmem>>, vector<128x128xbf16>,
    %cst_7 = arith.constant dense<0.000000e+00> : vector<128xf32>
    %8 = vector.multi_reduction <add>, %5, %cst_7 [0] : vector<128x128xf32> to vector<128xf32>
    %9 = vector.shape_cast %8 : vector<128xf32> to vector<1x128xf32>
    %10 = arith.mulf %5, %5 : vector<128x128xf32>
    %cst_8 = arith.constant dense<0.000000e+00> : vector<128xf32>
    %11 = vector.multi_reduction <add>, %10, %cst_8 [0] : vector<128x128xf32> to vector<128xf32>
    %12 = vector.shape_cast %11 : vector<128xf32> to vector<1x128xf32>
    %c0_9 = arith.constant 0 : index
    %c0_10 = arith.constant 0 : index
    %13 = vector.load %arg6[%c0_9, %c0_10] : memref<8x128xf32, #tpu.memory_space<vmem>>, vector<1x128xf32>
    tpu.vector_store %arg6[%c0_9, %c0_10], %9 {strides = array<i32>} : memref<8x128xf32, #tpu.memory_space<vmem>>, vector<1x128xf32>,
    %c1 = arith.constant 1 : index
    %c0_11 = arith.constant 0 : index
    %14 = vector.load %arg6[%c1, %c0_11] : memref<8x128xf32, #tpu.memory_space<vmem>>, vector<1x128xf32>
    tpu.vector_store %arg6[%c1, %c0_11], %12 {strides = array<i32>} : memref<8x128xf32, #tpu.memory_space<vmem>>, vector<1x128xf32>,
    %cst_12 = arith.constant 0.000000e+00 : f32
    %15 = vector.broadcast %cst_12 : f32 to vector<6x128xf32>
    %c2 = arith.constant 2 : index
    %c0_13 = arith.constant 0 : index
    %16 = vector.load %arg6[%c2, %c0_13] : memref<8x128xf32, #tpu.memory_space<vmem>>, vector<6x128xf32>
    tpu.vector_store %arg6[%c2, %c0_13], %15 {strides = array<i32>} : memref<8x128xf32, #tpu.memory_space<vmem>>, vector<6x128xf32>,
    return
  }
  func.func @transform_0(%arg0: i32, %arg1: i32) -> (i32, i32) {
    %c0_i32 = arith.constant 0 : i32
    %c0_i32_0 = arith.constant 0 : i32
    return %arg0, %c0_i32 : i32, i32
  }
  func.func @transform_1(%arg0: i32, %arg1: i32) -> (i32, i32) {
    %c0_i32 = arith.constant 0 : i32
    %c0_i32_0 = arith.constant 0 : i32
    return %c0_i32, %arg1 : i32, i32
  }
  func.func @transform_2(%arg0: i32, %arg1: i32) -> (i32, i32) {
    %c0_i32 = arith.constant 0 : i32
    %c0_i32_0 = arith.constant 0 : i32
    return %c0_i32, %arg1 : i32, i32
  }
  func.func @transform_3(%arg0: i32, %arg1: i32) -> (i32, i32) {
    %c0_i32 = arith.constant 0 : i32
    return %arg0, %arg1 : i32, i32
  }
  func.func @transform_4(%arg0: i32, %arg1: i32) -> (i32, i32) {
    %c0_i32 = arith.constant 0 : i32
    return %arg0, %arg1 : i32, i32
  }
}

module attributes {stable_mosaic.version = 11 : i64} {
  func.func @_tail_bn_shortcut_kernel(%arg0: i32, %arg1: memref<8x128xf32, #tpu.memory_space<vmem>>, %arg2: memref<1x128xf32, #tpu.memory_space<vmem>>, %arg3: memref<1x128xf32, #tpu.memory_space<vmem>>, %arg4: memref<8x128xf32, #tpu.memory_space<vmem>>, %arg5: memref<1x128xf32, #tpu.memory_space<vmem>>, %arg6: memref<1x128xf32, #tpu.memory_space<vmem>>, %arg7: memref<128x128xbf16, #tpu.memory_space<vmem>>, %arg8: memref<128x128xbf16, #tpu.memory_space<vmem>>, %arg9: memref<128x128xf32, #tpu.memory_space<vmem>>) attributes {dimension_semantics = [#tpu.dimension_semantics<parallel>], iteration_bounds = array<i64: 1>, scalar_prefetch = 0 : i64, scratch_operands = 0 : i64, tpu.core_type = #tpu.core_type<tc>, window_params = [{pipeline_mode = #tpu.pipeline_mode<synchronous>, transform_indices = @transform_0, window_bounds = array<i64: 8, 128>}, {pipeline_mode = #tpu.pipeline_mode<synchronous>, transform_indices = @transform_1, window_bounds = array<i64: 1, 128>}, {pipeline_mode = #tpu.pipeline_mode<synchronous>, transform_indices = @transform_2, window_bounds = array<i64: 1, 128>}, {pipeline_mode = #tpu.pipeline_mode<synchronous>, transform_indices = @transform_3, window_bounds = array<i64: 8, 128>}, {pipeline_mode = #tpu.pipeline_mode<synchronous>, transform_indices = @transform_4, window_bounds = array<i64: 1, 128>}, {pipeline_mode = #tpu.pipeline_mode<synchronous>, transform_indices = @transform_5, window_bounds = array<i64: 1, 128>}, {transform_indices = @transform_6, window_bounds = array<i64: 128, 128>}, {transform_indices = @transform_7, window_bounds = array<i64: 128, 128>}, {transform_indices = @transform_8, window_bounds = array<i64: 128, 128>}]} {
    %c0 = arith.constant 0 : index
    %c0_0 = arith.constant 0 : index
    %0 = vector.load %arg1[%c0, %c0_0] : memref<8x128xf32, #tpu.memory_space<vmem>>, vector<8x128xf32>
    %1 = vector.extract_strided_slice %0 {offsets = [0, 0], sizes = [1, 128], strides = [1, 1]} : vector<8x128xf32> to vector<1x128xf32>
    %2 = vector.extract_strided_slice %0 {offsets = [1, 0], sizes = [1, 128], strides = [1, 1]} : vector<8x128xf32> to vector<1x128xf32>
    %c0_1 = arith.constant 0 : index
    %c0_2 = arith.constant 0 : index
    %3 = vector.load %arg2[%c0_1, %c0_2] : memref<1x128xf32, #tpu.memory_space<vmem>>, vector<1x128xf32>
    %c0_3 = arith.constant 0 : index
    %c0_4 = arith.constant 0 : index
    %4 = vector.load %arg3[%c0_3, %c0_4] : memref<1x128xf32, #tpu.memory_space<vmem>>, vector<1x128xf32>
    %cst = arith.constant 7.812500e-03 : f32
    %5 = vector.broadcast %cst : f32 to vector<1x128xf32>
    %6 = arith.mulf %1, %5 : vector<1x128xf32>
    %cst_5 = arith.constant 7.812500e-03 : f32
    %7 = vector.broadcast %cst_5 : f32 to vector<1x128xf32>
    %8 = arith.mulf %2, %7 : vector<1x128xf32>
    %9 = arith.mulf %6, %6 : vector<1x128xf32>
    %10 = arith.subf %8, %9 : vector<1x128xf32>
    %cst_6 = arith.constant 0.000000e+00 : f32
    %11 = vector.broadcast %cst_6 : f32 to vector<1x128xf32>
    %12 = arith.maximumf %10, %11 : vector<1x128xf32>
    %cst_7 = arith.constant 9.99999974E-6 : f32
    %13 = vector.broadcast %cst_7 : f32 to vector<1x128xf32>
    %14 = arith.addf %12, %13 : vector<1x128xf32>
    %15 = math.rsqrt %14 : vector<1x128xf32>
    %16 = arith.mulf %3, %15 : vector<1x128xf32>
    %17 = arith.mulf %6, %16 : vector<1x128xf32>
    %18 = arith.subf %4, %17 : vector<1x128xf32>
    %c0_8 = arith.constant 0 : index
    %c0_9 = arith.constant 0 : index
    %19 = vector.load %arg4[%c0_8, %c0_9] : memref<8x128xf32, #tpu.memory_space<vmem>>, vector<8x128xf32>
    %20 = vector.extract_strided_slice %19 {offsets = [0, 0], sizes = [1, 128], strides = [1, 1]} : vector<8x128xf32> to vector<1x128xf32>
    %21 = vector.extract_strided_slice %19 {offsets = [1, 0], sizes = [1, 128], strides = [1, 1]} : vector<8x128xf32> to vector<1x128xf32>
    %c0_10 = arith.constant 0 : index
    %c0_11 = arith.constant 0 : index
    %22 = vector.load %arg5[%c0_10, %c0_11] : memref<1x128xf32, #tpu.memory_space<vmem>>, vector<1x128xf32>
    %c0_12 = arith.constant 0 : index
    %c0_13 = arith.constant 0 : index
    %23 = vector.load %arg6[%c0_12, %c0_13] : memref<1x128xf32, #tpu.memory_space<vmem>>, vector<1x128xf32>
    %cst_14 = arith.constant 7.812500e-03 : f32
    %24 = vector.broadcast %cst_14 : f32 to vector<1x128xf32>
    %25 = arith.mulf %20, %24 : vector<1x128xf32>
    %cst_15 = arith.constant 7.812500e-03 : f32
    %26 = vector.broadcast %cst_15 : f32 to vector<1x128xf32>
    %27 = arith.mulf %21, %26 : vector<1x128xf32>
    %28 = arith.mulf %25, %25 : vector<1x128xf32>
    %29 = arith.subf %27, %28 : vector<1x128xf32>
    %cst_16 = arith.constant 0.000000e+00 : f32
    %30 = vector.broadcast %cst_16 : f32 to vector<1x128xf32>
    %31 = arith.maximumf %29, %30 : vector<1x128xf32>
    %cst_17 = arith.constant 9.99999974E-6 : f32
    %32 = vector.broadcast %cst_17 : f32 to vector<1x128xf32>
    %33 = arith.addf %31, %32 : vector<1x128xf32>
    %34 = math.rsqrt %33 : vector<1x128xf32>
    %35 = arith.mulf %22, %34 : vector<1x128xf32>
    %36 = arith.mulf %25, %35 : vector<1x128xf32>
    %37 = arith.subf %23, %36 : vector<1x128xf32>
    %c0_18 = arith.constant 0 : index
    %c0_19 = arith.constant 0 : index
    %38 = vector.load %arg7[%c0_18, %c0_19] : memref<128x128xbf16, #tpu.memory_space<vmem>>, vector<128x128xbf16>
    %39 = arith.extf %38 : vector<128x128xbf16> to vector<128x128xf32>
    %40 = vector.broadcast %16 : vector<1x128xf32> to vector<128x128xf32>
    %41 = arith.mulf %39, %40 : vector<128x128xf32>
    %42 = vector.broadcast %18 : vector<1x128xf32> to vector<128x128xf32>
    %43 = arith.addf %41, %42 : vector<128x128xf32>
    %cst_20 = arith.constant 0.000000e+00 : f32
    %44 = vector.broadcast %cst_20 : f32 to vector<128x128xf32>
    %45 = arith.maximumf %43, %44 : vector<128x128xf32>
    %c0_21 = arith.constant 0 : index
    %c0_22 = arith.constant 0 : index
    %46 = vector.load %arg8[%c0_21, %c0_22] : memref<128x128xbf16, #tpu.memory_space<vmem>>, vector<128x128xbf16>
    %47 = arith.extf %46 : vector<128x128xbf16> to vector<128x128xf32>
    %48 = vector.broadcast %35 : vector<1x128xf32> to vector<128x128xf32>
    %49 = arith.mulf %47, %48 : vector<128x128xf32>
    %50 = vector.broadcast %37 : vector<1x128xf32> to vector<128x128xf32>
    %51 = arith.addf %49, %50 : vector<128x128xf32>
    %52 = arith.addf %45, %51 : vector<128x128xf32>
    %cst_23 = arith.constant 0.000000e+00 : f32
    %53 = vector.broadcast %cst_23 : f32 to vector<128x128xf32>
    %54 = arith.maximumf %52, %53 : vector<128x128xf32>
    %c0_24 = arith.constant 0 : index
    %c0_25 = arith.constant 0 : index
    %55 = vector.load %arg9[%c0_24, %c0_25] : memref<128x128xf32, #tpu.memory_space<vmem>>, vector<128x128xf32>
    tpu.vector_store %arg9[%c0_24, %c0_25], %54 {strides = array<i32>} : memref<128x128xf32, #tpu.memory_space<vmem>>, vector<128x128xf32>,
    return
  }
  func.func @transform_0(%arg0: i32) -> (i32, i32) {
    %c0_i32 = arith.constant 0 : i32
    %c0_i32_0 = arith.constant 0 : i32
    %c0_i32_1 = arith.constant 0 : i32
    return %c0_i32, %c0_i32_0 : i32, i32
  }
  func.func @transform_1(%arg0: i32) -> (i32, i32) {
    %c0_i32 = arith.constant 0 : i32
    %c0_i32_0 = arith.constant 0 : i32
    %c0_i32_1 = arith.constant 0 : i32
    return %c0_i32, %c0_i32_0 : i32, i32
  }
  func.func @transform_2(%arg0: i32) -> (i32, i32) {
    %c0_i32 = arith.constant 0 : i32
    %c0_i32_0 = arith.constant 0 : i32
    %c0_i32_1 = arith.constant 0 : i32
    return %c0_i32, %c0_i32_0 : i32, i32
  }
  func.func @transform_3(%arg0: i32) -> (i32, i32) {
    %c0_i32 = arith.constant 0 : i32
    %c0_i32_0 = arith.constant 0 : i32
    %c0_i32_1 = arith.constant 0 : i32
    return %c0_i32, %c0_i32_0 : i32, i32
  }
  func.func @transform_4(%arg0: i32) -> (i32, i32) {
    %c0_i32 = arith.constant 0 : i32
    %c0_i32_0 = arith.constant 0 : i32
    %c0_i32_1 = arith.constant 0 : i32
    return %c0_i32, %c0_i32_0 : i32, i32
  }
  func.func @transform_5(%arg0: i32) -> (i32, i32) {
    %c0_i32 = arith.constant 0 : i32
    %c0_i32_0 = arith.constant 0 : i32
    %c0_i32_1 = arith.constant 0 : i32
    return %c0_i32, %c0_i32_0 : i32, i32
  }
  func.func @transform_6(%arg0: i32) -> (i32, i32) {
    %c0_i32 = arith.constant 0 : i32
    %c0_i32_0 = arith.constant 0 : i32
    return %arg0, %c0_i32 : i32, i32
  }
  func.func @transform_7(%arg0: i32) -> (i32, i32) {
    %c0_i32 = arith.constant 0 : i32
    %c0_i32_0 = arith.constant 0 : i32
    return %arg0, %c0_i32 : i32, i32
  }
  func.func @transform_8(%arg0: i32) -> (i32, i32) {
    %c0_i32 = arith.constant 0 : i32
    %c0_i32_0 = arith.constant 0 : i32
    return %arg0, %c0_i32 : i32, i32
  }
}

</mosaic_0001>

<llo_original>
// kernel: resblock_forward.6
$region0: #{resblock_forward.6}
  #allocation0 [shape = 'u32[]', space=smem, size = 0x4, offset = 0x4, fixed_abs, tag = 'smem constant byte address 0x4 - core index']
  #allocation1 [shape = 'u32[144,128]{1,0:T(1,128)}', space=vmem, size = 0x12000, scoped, tag = 'internal scratch']
  %s0 = inlined_call_operand.vmem [shape: f32[8,128], index: 0, kind: input, shape index: {}]
  %s1 = inlined_call_operand.vmem [shape: f32[1,128], index: 1, kind: input, shape index: {}]
  %s2 = inlined_call_operand.vmem [shape: f32[1,128], index: 2, kind: input, shape index: {}]
  %s3 = inlined_call_operand.vmem [shape: bf16[128,128], index: 3, kind: input, shape index: {}]
  %s4 = inlined_call_operand.vmem [shape: bf16[128,128], index: 4, kind: output, shape index: {}]
  %s5 = sld [smem:[#allocation0]]
  $region26: #{resblock_forward.6} parent=0
    _
  %s7 = ssub.s32 1, %s5
  %s8 = scalar_select 0, %s7, %s5
  // Predicated region
  $region2: #{resblock_forward.6} parent=0 // pred_check
    _
  $region3: #{resblock_forward.6} parent=0 // pred_check_branch
    %10 = sbr.rel (0) target = $region5
  $region4: #{resblock_forward.6} parent=0 // pred_region
    _
  $region5: #{resblock_forward.6} parent=0 // pred_fallthru
    _
  // Predicated region
  $region6: #{resblock_forward.6} parent=0 // pred_check
    _
  $region7: #{resblock_forward.6} parent=0 // pred_check_branch
    %12 = sbr.rel (0) target = $region9
  $region8: #{resblock_forward.6} parent=0 // pred_region
    _
  $region9: #{resblock_forward.6} parent=0 // pred_fallthru
    _
  // Predicated region
  $region10: #{resblock_forward.6} parent=0 // pred_check
    _
  $region11: #{resblock_forward.6} parent=0 // pred_check_branch
    %14 = sbr.rel (0) target = $region13
  $region12: #{resblock_forward.6} parent=0 // pred_region
    _
  $region13: #{resblock_forward.6} parent=0 // pred_fallthru
    _
  // Predicated region
  $region14: #{resblock_forward.6} parent=0 // pred_check
    _
  $region15: #{resblock_forward.6} parent=0 // pred_check_branch
    %16 = sbr.rel (0) target = $region17
  $region16: #{resblock_forward.6} parent=0 // pred_region
    _
  $region17: #{resblock_forward.6} parent=0 // pred_fallthru
    _
  %v17 = vld [vmem:[%s0] sm:$0xff]
  %v18 = vld [vmem:[%s1] sm:$0x1]
  %v19 = vld [vmem:[%s2] sm:$0x1]
  %v20 = vmul.f32 %v17, 0.0078125
  %v21 = vmul.f32 %v20, %v20
  %v23 = vrot.slane %v21, 7
  %v25 = vsub.f32 %v20, %v23
  %v26 = vmax.f32 %v25, 0.0
  %v27 = vadd.f32 %v26, 1e-05
  %v28 = vrsqrt.pop %v27
  %v31 = vunpack.c.l.s4 1966171168
  %v32 = vunpack.c.0.s8 %v31
  %v33 = vlaneseq
  %v34 = vshrl.u32 %v33, 7
  %v35 = vsub.s32 %v32, %v34
  %v36 = vrot.slane %v28, %v35
  %v37 = vcombine.high %v36, %v36
  %v39 = vunpack.c.l.s4 1966171168
  %v40 = vunpack.c.0.s8 %v39
  %v41 = vlaneseq
  %v42 = vshrl.u32 %v41, 7
  %v43 = vsub.s32 %v40, %v42
  %v44 = vrot.slane %v37, %v43
  %v46 = vmul.f32 %v18, %v44
  %v47 = vmul.f32 %v20, %v46
  %v48 = vsub.f32 %v19, %v47
  %v49 = vld [vmem:[%s3] sm:$0xf]
  %v50 = vld [vmem:[%s3 + $0x4] sm:$0xf]
  %v51 = vld [vmem:[%s3 + $0x8] sm:$0xf]
  %v52 = vld [vmem:[%s3 + $0xc] sm:$0xf]
  %v53 = vld [vmem:[%s3 + $0x10] sm:$0xf]
  %v54 = vld [vmem:[%s3 + $0x14] sm:$0xf]
  %v55 = vld [vmem:[%s3 + $0x18] sm:$0xf]
  %v56 = vld [vmem:[%s3 + $0x1c] sm:$0xf]
  %v57 = vld [vmem:[%s3 + $0x20] sm:$0xf]
  %v58 = vld [vmem:[%s3 + $0x24] sm:$0xf]
  %v59 = vld [vmem:[%s3 + $0x28] sm:$0xf]
  %v60 = vld [vmem:[%s3 + $0x2c] sm:$0xf]
  %v61 = vld [vmem:[%s3 + $0x30] sm:$0xf]
  %v62 = vld [vmem:[%s3 + $0x34] sm:$0xf]
  %v63 = vld [vmem:[%s3 + $0x38] sm:$0xf]
  %v64 = vld [vmem:[%s3 + $0x3c] sm:$0xf]
  %v65 = vunpack.c.l.bf16 %v49
  %v66 = vunpack.c.l.bf16 %v50
  %v67 = vunpack.c.l.bf16 %v51
  %v68 = vunpack.c.l.bf16 %v52
  %v69 = vunpack.c.l.bf16 %v53
  %v70 = vunpack.c.l.bf16 %v54
  %v71 = vunpack.c.l.bf16 %v55
  %v72 = vunpack.c.l.bf16 %v56
  %v73 = vunpack.c.l.bf16 %v57
  %v74 = vunpack.c.l.bf16 %v58
  %v75 = vunpack.c.l.bf16 %v59
  %v76 = vunpack.c.l.bf16 %v60
  %v77 = vunpack.c.l.bf16 %v61
  %v78 = vunpack.c.l.bf16 %v62
  %v79 = vunpack.c.l.bf16 %v63
  %v80 = vunpack.c.l.bf16 %v64
  %v82 = vlaneseq
  %v83 = vshrl.u32 %v82, 7
  %v84 = vsub.s32 0, %v83
  %v85 = vrot.slane %v46, %v84
  %v87 = vmul.f32 %v65, %v85
  %v88 = vmul.f32 %v66, %v85
  %v89 = vmul.f32 %v67, %v85
  %v90 = vmul.f32 %v68, %v85
  %v91 = vmul.f32 %v69, %v85
  %v92 = vmul.f32 %v70, %v85
  %v93 = vmul.f32 %v71, %v85
  %v94 = vmul.f32 %v72, %v85
  %v95 = vmul.f32 %v73, %v85
  %v96 = vmul.f32 %v74, %v85
  %v97 = vmul.f32 %v75, %v85
  %v98 = vmul.f32 %v76, %v85
  %v99 = vmul.f32 %v77, %v85
  %v100 = vmul.f32 %v78, %v85
  %v101 = vmul.f32 %v79, %v85
  %v102 = vmul.f32 %v80, %v85
  %v104 = vlaneseq
  %v105 = vshrl.u32 %v104, 7
  %v106 = vsub.s32 0, %v105
  %v107 = vrot.slane %v48, %v106
  %v109 = vadd.f32 %v87, %v107
  %v110 = vadd.f32 %v88, %v107
  %v111 = vadd.f32 %v89, %v107
  %v112 = vadd.f32 %v90, %v107
  %v113 = vadd.f32 %v91, %v107
  %v114 = vadd.f32 %v92, %v107
  %v115 = vadd.f32 %v93, %v107
  %v116 = vadd.f32 %v94, %v107
  %v117 = vadd.f32 %v95, %v107
  %v118 = vadd.f32 %v96, %v107
  %v119 = vadd.f32 %v97, %v107
  %v120 = vadd.f32 %v98, %v107
  %v121 = vadd.f32 %v99, %v107
  %v122 = vadd.f32 %v100, %v107
  %v123 = vadd.f32 %v101, %v107
  %v124 = vadd.f32 %v102, %v107
  %v125 = vmax.f32 %v109, 0.0
  %v126 = vmax.f32 %v110, 0.0
  %v127 = vmax.f32 %v111, 0.0
  %v128 = vmax.f32 %v112, 0.0
  %v129 = vmax.f32 %v113, 0.0
  %v130 = vmax.f32 %v114, 0.0
  %v131 = vmax.f32 %v115, 0.0
  %v132 = vmax.f32 %v116, 0.0
  %v133 = vmax.f32 %v117, 0.0
  %v134 = vmax.f32 %v118, 0.0
  %v135 = vmax.f32 %v119, 0.0
  %v136 = vmax.f32 %v120, 0.0
  %v137 = vmax.f32 %v121, 0.0
  %v138 = vmax.f32 %v122, 0.0
  %v139 = vmax.f32 %v123, 0.0
  %v140 = vmax.f32 %v124, 0.0
  %v141 = vpack.c.bf16 %v126, %v125
  %v142 = vpack.c.bf16 %v128, %v127
  %v143 = vpack.c.bf16 %v130, %v129
  %v144 = vpack.c.bf16 %v132, %v131
  %v145 = vpack.c.bf16 %v134, %v133
  %v146 = vpack.c.bf16 %v136, %v135
  %v147 = vpack.c.bf16 %v138, %v137
  %v148 = vpack.c.bf16 %v140, %v139
  %v157 = vunpack.c.l.b16 %v141
  %v158 = vunpack.c.h.b16 %v141
  %v159 = vunpack.c.l.b16 %v142
  %v160 = vunpack.c.h.b16 %v142
  %v161 = vunpack.c.l.b16 %v143
  %v162 = vunpack.c.h.b16 %v143
  %v163 = vunpack.c.l.b16 %v144
  %v164 = vunpack.c.h.b16 %v144
  %v165 = vunpack.c.l.b16 %v145
  %v166 = vunpack.c.h.b16 %v145
  %v167 = vunpack.c.l.b16 %v146
  %v168 = vunpack.c.h.b16 %v146
  %v169 = vunpack.c.l.b16 %v147
  %v170 = vunpack.c.h.b16 %v147
  %v171 = vunpack.c.l.b16 %v148
  %v172 = vunpack.c.h.b16 %v148
  %v173 = vpack.c.b16 %v157, %v157
  %v174 = vpack.c.b16 %v158, %v158
  %v175 = vpack.c.b16 %v159, %v159
  %v176 = vpack.c.b16 %v160, %v160
  %v177 = vpack.c.b16 %v161, %v161
  %v178 = vpack.c.b16 %v162, %v162
  %v179 = vpack.c.b16 %v163, %v163
  %v180 = vpack.c.b16 %v164, %v164
  %v181 = vpack.c.b16 %v165, %v165
  %v182 = vpack.c.b16 %v166, %v166
  %v183 = vpack.c.b16 %v167, %v167
  %v184 = vpack.c.b16 %v168, %v168
  %v185 = vpack.c.b16 %v169, %v169
  %v186 = vpack.c.b16 %v170, %v170
  %v187 = vpack.c.b16 %v171, %v171
  %v188 = vpack.c.b16 %v172, %v172
  %205 = vst [vmem:[%s4] sm:$0xf] %v173
  %206 = vst [vmem:[%s4 + $0x4] sm:$0xf] %v174
  %207 = vst [vmem:[%s4 + $0x8] sm:$0xf] %v175
  %208 = vst [vmem:[%s4 + $0xc] sm:$0xf] %v176
  %209 = vst [vmem:[%s4 + $0x10] sm:$0xf] %v177
  %210 = vst [vmem:[%s4 + $0x14] sm:$0xf] %v178
  %211 = vst [vmem:[%s4 + $0x18] sm:$0xf] %v179
  %212 = vst [vmem:[%s4 + $0x1c] sm:$0xf] %v180
  %213 = vst [vmem:[%s4 + $0x20] sm:$0xf] %v181
  %214 = vst [vmem:[%s4 + $0x24] sm:$0xf] %v182
  %215 = vst [vmem:[%s4 + $0x28] sm:$0xf] %v183
  %216 = vst [vmem:[%s4 + $0x2c] sm:$0xf] %v184
  %217 = vst [vmem:[%s4 + $0x30] sm:$0xf] %v185
  %218 = vst [vmem:[%s4 + $0x34] sm:$0xf] %v186
  %219 = vst [vmem:[%s4 + $0x38] sm:$0xf] %v187
  %220 = vst [vmem:[%s4 + $0x3c] sm:$0xf] %v188
  // Predicated region
  $region18: #{resblock_forward.6} parent=0 // pred_check
    _
  $region19: #{resblock_forward.6} parent=0 // pred_check_branch
    %222 = sbr.rel (0) target = $region21
  $region20: #{resblock_forward.6} parent=0 // pred_region
    _
  $region21: #{resblock_forward.6} parent=0 // pred_fallthru
    _
  // Predicated region
  $region22: #{resblock_forward.6} parent=0 // pred_check
    _
  $region23: #{resblock_forward.6} parent=0 // pred_check_branch
    %224 = sbr.rel (0) target = $region25
  $region24: #{resblock_forward.6} parent=0 // pred_region
    _
  $region25: #{resblock_forward.6} parent=0 // pred_fallthru
    _

// kernel: resblock_forward.5
$region0: #{resblock_forward.5}
  #allocation0 [shape = 'u32[]', space=smem, size = 0x4, offset = 0x4, fixed_abs, tag = 'smem constant byte address 0x4 - core index']
  #allocation1 [shape = 'u32[144,128]{1,0:T(1,128)}', space=vmem, size = 0x12000, scoped, tag = 'internal scratch']
  %s0 = inlined_call_operand.vmem [shape: bf16[128,256], index: 0, kind: input, shape index: {}]
  %s1 = inlined_call_operand.vmem [shape: bf16[256,128], index: 1, kind: input, shape index: {}]
  %s2 = inlined_call_operand.vmem [shape: f32[1,128], index: 2, kind: input, shape index: {}]
  %s3 = inlined_call_operand.vmem [shape: bf16[128,128], index: 3, kind: output, shape index: {0}]
  %s4 = inlined_call_operand.vmem [shape: f32[8,128], index: 4, kind: output, shape index: {1}]
  %5 = xla_tuple %s3, %s4
  %s6 = sld [smem:[#allocation0]]
  $region30: #{resblock_forward.5} parent=0
    _
  %s8 = ssub.s32 1, %s6
  %s9 = scalar_select 0, %s8, %s6
  // Predicated region
  $region2: #{resblock_forward.5} parent=0 // pred_check
    _
  $region3: #{resblock_forward.5} parent=0 // pred_check_branch
    %11 = sbr.rel (0) target = $region5
  $region4: #{resblock_forward.5} parent=0 // pred_region
    _
  $region5: #{resblock_forward.5} parent=0 // pred_fallthru
    _
  // Predicated region
  $region6: #{resblock_forward.5} parent=0 // pred_check
    _
  $region7: #{resblock_forward.5} parent=0 // pred_check_branch
    %13 = sbr.rel (0) target = $region9
  $region8: #{resblock_forward.5} parent=0 // pred_region
    _
  $region9: #{resblock_forward.5} parent=0 // pred_fallthru
    _
  // Predicated region
  $region10: #{resblock_forward.5} parent=0 // pred_check
    _
  $region11: #{resblock_forward.5} parent=0 // pred_check_branch
    %15 = sbr.rel (0) target = $region13
  $region12: #{resblock_forward.5} parent=0 // pred_region
    _
  $region13: #{resblock_forward.5} parent=0 // pred_fallthru
    _
  %v17 = vld [vmem:[%s0] sm:$0xff]
  %v18 = vld [vmem:[%s0 + $0x8] sm:$0xff]
  %v19 = vld [vmem:[%s0 + $0x10] sm:$0xff]
  %v20 = vld [vmem:[%s0 + $0x18] sm:$0xff]
  %v21 = vld [vmem:[%s0 + $0x20] sm:$0xff]
  %v22 = vld [vmem:[%s0 + $0x28] sm:$0xff]
  %v23 = vld [vmem:[%s0 + $0x30] sm:$0xff]
  %v24 = vld [vmem:[%s0 + $0x38] sm:$0xff]
  %v25 = vld [vmem:[%s0 + $0x40] sm:$0xff]
  %v26 = vld [vmem:[%s0 + $0x48] sm:$0xff]
  %v27 = vld [vmem:[%s0 + $0x50] sm:$0xff]
  %v28 = vld [vmem:[%s0 + $0x58] sm:$0xff]
  %v29 = vld [vmem:[%s0 + $0x60] sm:$0xff]
  %v30 = vld [vmem:[%s0 + $0x68] sm:$0xff]
  %v31 = vld [vmem:[%s0 + $0x70] sm:$0xff]
  %v32 = vld [vmem:[%s0 + $0x78] sm:$0xff]
  %v33 = vld [vmem:[%s1] sm:$0xf]
  %v34 = vld [vmem:[%s1 + $0x4] sm:$0xf]
  %v35 = vld [vmem:[%s1 + $0x8] sm:$0xf]
  %v36 = vld [vmem:[%s1 + $0xc] sm:$0xf]
  %v37 = vld [vmem:[%s1 + $0x10] sm:$0xf]
  %v38 = vld [vmem:[%s1 + $0x14] sm:$0xf]
  %v39 = vld [vmem:[%s1 + $0x18] sm:$0xf]
  %v40 = vld [vmem:[%s1 + $0x1c] sm:$0xf]
  %v41 = vld [vmem:[%s1 + $0x20] sm:$0xf]
  %v42 = vld [vmem:[%s1 + $0x24] sm:$0xf]
  %v43 = vld [vmem:[%s1 + $0x28] sm:$0xf]
  %v44 = vld [vmem:[%s1 + $0x2c] sm:$0xf]
  %v45 = vld [vmem:[%s1 + $0x30] sm:$0xf]
  %v46 = vld [vmem:[%s1 + $0x34] sm:$0xf]
  %v47 = vld [vmem:[%s1 + $0x38] sm:$0xf]
  %v48 = vld [vmem:[%s1 + $0x3c] sm:$0xf]
  %v49 = vld [vmem:[%s1 + $0x40] sm:$0xf]
  %v50 = vld [vmem:[%s1 + $0x44] sm:$0xf]
  %v51 = vld [vmem:[%s1 + $0x48] sm:$0xf]
  %v52 = vld [vmem:[%s1 + $0x4c] sm:$0xf]
  %v53 = vld [vmem:[%s1 + $0x50] sm:$0xf]
  %v54 = vld [vmem:[%s1 + $0x54] sm:$0xf]
  %v55 = vld [vmem:[%s1 + $0x58] sm:$0xf]
  %v56 = vld [vmem:[%s1 + $0x5c] sm:$0xf]
  %v57 = vld [vmem:[%s1 + $0x60] sm:$0xf]
  %v58 = vld [vmem:[%s1 + $0x64] sm:$0xf]
  %v59 = vld [vmem:[%s1 + $0x68] sm:$0xf]
  %v60 = vld [vmem:[%s1 + $0x6c] sm:$0xf]
  %v61 = vld [vmem:[%s1 + $0x70] sm:$0xf]
  %v62 = vld [vmem:[%s1 + $0x74] sm:$0xf]
  %v63 = vld [vmem:[%s1 + $0x78] sm:$0xf]
  %v64 = vld [vmem:[%s1 + $0x7c] sm:$0xf]
  %v65 = vld [vmem:[%s2] sm:$0x1]
  %v67 = vlaneseq
  %v68 = vshrl.u32 %v67, 7
  %v69 = vsub.s32 0, %v68
  %v70 = vrot.slane %v65, %v69
  %v88 = vunpack.c.l.b16 %v17
  %v89 = vunpack.c.h.b16 %v17
  %v90 = vunpack.c.l.b16 %v18
  %v91 = vunpack.c.h.b16 %v18
  %v92 = vunpack.c.l.b16 %v19
  %v93 = vunpack.c.h.b16 %v19
  %v94 = vunpack.c.l.b16 %v20
  %v95 = vunpack.c.h.b16 %v20
  %v96 = vunpack.c.l.b16 %v21
  %v97 = vunpack.c.h.b16 %v21
  %v98 = vunpack.c.l.b16 %v22
  %v99 = vunpack.c.h.b16 %v22
  %v100 = vunpack.c.l.b16 %v23
  %v101 = vunpack.c.h.b16 %v23
  %v102 = vunpack.c.l.b16 %v24
  %v103 = vunpack.c.h.b16 %v24
  %v104 = vunpack.c.l.b16 %v25
  %v105 = vunpack.c.h.b16 %v25
  %v106 = vunpack.c.l.b16 %v26
  %v107 = vunpack.c.h.b16 %v26
  %v108 = vunpack.c.l.b16 %v27
  %v109 = vunpack.c.h.b16 %v27
  %v110 = vunpack.c.l.b16 %v28
  %v111 = vunpack.c.h.b16 %v28
  %v112 = vunpack.c.l.b16 %v29
  %v113 = vunpack.c.h.b16 %v29
  %v114 = vunpack.c.l.b16 %v30
  %v115 = vunpack.c.h.b16 %v30
  %v116 = vunpack.c.l.b16 %v31
  %v117 = vunpack.c.h.b16 %v31
  %v118 = vunpack.c.l.b16 %v32
  %v119 = vunpack.c.h.b16 %v32
  %v120 = vpack.c.b16 %v90, %v88
  %v121 = vpack.c.b16 %v91, %v89
  %v122 = vpack.c.b16 %v94, %v92
  %v123 = vpack.c.b16 %v95, %v93
  %v124 = vpack.c.b16 %v98, %v96
  %v125 = vpack.c.b16 %v99, %v97
  %v126 = vpack.c.b16 %v102, %v100
  %v127 = vpack.c.b16 %v103, %v101
  %v128 = vpack.c.b16 %v106, %v104
  %v129 = vpack.c.b16 %v107, %v105
  %v130 = vpack.c.b16 %v110, %v108
  %v131 = vpack.c.b16 %v111, %v109
  %v132 = vpack.c.b16 %v114, %v112
  %v133 = vpack.c.b16 %v115, %v113
  %v134 = vpack.c.b16 %v118, %v116
  %v135 = vpack.c.b16 %v119, %v117
  %v184 = vunpack.c.l.b16 %v33
  %v185 = vunpack.c.l.b16 %v34
  %v186 = vunpack.c.l.b16 %v35
  %v187 = vunpack.c.l.b16 %v36
  %v188 = vunpack.c.l.b16 %v37
  %v189 = vunpack.c.l.b16 %v38
  %v190 = vunpack.c.l.b16 %v39
  %v191 = vunpack.c.l.b16 %v40
  %v192 = vunpack.c.l.b16 %v41
  %v193 = vunpack.c.l.b16 %v42
  %v194 = vunpack.c.l.b16 %v43
  %v195 = vunpack.c.l.b16 %v44
  %v196 = vunpack.c.l.b16 %v45
  %v197 = vunpack.c.l.b16 %v46
  %v198 = vunpack.c.l.b16 %v47
  %v199 = vunpack.c.l.b16 %v48
  %v200 = vunpack.c.l.b16 %v49
  %v201 = vunpack.c.l.b16 %v50
  %v202 = vunpack.c.l.b16 %v51
  %v203 = vunpack.c.l.b16 %v52
  %v204 = vunpack.c.l.b16 %v53
  %v205 = vunpack.c.l.b16 %v54
  %v206 = vunpack.c.l.b16 %v55
  %v207 = vunpack.c.l.b16 %v56
  %v208 = vunpack.c.l.b16 %v57
  %v209 = vunpack.c.l.b16 %v58
  %v210 = vunpack.c.l.b16 %v59
  %v211 = vunpack.c.l.b16 %v60
  %v212 = vunpack.c.l.b16 %v61
  %v213 = vunpack.c.l.b16 %v62
  %v214 = vunpack.c.l.b16 %v63
  %v215 = vunpack.c.l.b16 %v64
  %v216 = vpack.c.b16 %v185, %v184
  %v217 = vpack.c.b16 %v187, %v186
  %v218 = vpack.c.b16 %v189, %v188
  %v219 = vpack.c.b16 %v191, %v190
  %v220 = vpack.c.b16 %v193, %v192
  %v221 = vpack.c.b16 %v195, %v194
  %v222 = vpack.c.b16 %v197, %v196
  %v223 = vpack.c.b16 %v199, %v198
  %v224 = vpack.c.b16 %v201, %v200
  %v225 = vpack.c.b16 %v203, %v202
  %v226 = vpack.c.b16 %v205, %v204
  %v227 = vpack.c.b16 %v207, %v206
  %v228 = vpack.c.b16 %v209, %v208
  %v229 = vpack.c.b16 %v211, %v210
  %v230 = vpack.c.b16 %v213, %v212
  %v231 = vpack.c.b16 %v215, %v214
  %248 = vmatprep.subr.bf16.mxu0 0
  %249 = vmatpush1.bf16.msra.mxu0 %v216
  %250 = vmatprep.subr.bf16.mxu0 0
  %251 = vmatpush1.bf16.msra.mxu0 %v217
  %252 = vmatprep.subr.bf16.mxu0 0
  %253 = vmatpush1.bf16.msra.mxu0 %v218
  %254 = vmatprep.subr.bf16.mxu0 0
  %255 = vmatpush1.bf16.msra.mxu0 %v219
  %256 = vmatprep.subr.bf16.mxu0 0
  %257 = vmatpush1.bf16.msra.mxu0 %v220
  %258 = vmatprep.subr.bf16.mxu0 0
  %259 = vmatpush1.bf16.msra.mxu0 %v221
  %260 = vmatprep.subr.bf16.mxu0 0
  %261 = vmatpush1.bf16.msra.mxu0 %v222
  %262 = vmatprep.subr.bf16.mxu0 0
  %263 = vmatpush1.bf16.msra.mxu0 %v223
  %264 = vmatprep.subr.bf16.mxu0 0
  %265 = vmatpush1.bf16.msra.mxu0 %v224
  %266 = vmatprep.subr.bf16.mxu0 0
  %267 = vmatpush1.bf16.msra.mxu0 %v225
  %268 = vmatprep.subr.bf16.mxu0 0
  %269 = vmatpush1.bf16.msra.mxu0 %v226
  %270 = vmatprep.subr.bf16.mxu0 0
  %271 = vmatpush1.bf16.msra.mxu0 %v227
  %272 = vmatprep.subr.bf16.mxu0 0
  %273 = vmatpush1.bf16.msra.mxu0 %v228
  %274 = vmatprep.subr.bf16.mxu0 0
  %275 = vmatpush1.bf16.msra.mxu0 %v229
  %276 = vmatprep.subr.bf16.mxu0 0
  %277 = vmatpush1.bf16.msra.mxu0 %v230
  %278 = vmatprep.subr.bf16.mxu0 0
  %279 = vmatpush1.bf16.msra.mxu0 %v231
  %280 = vmatprep.mubr.bf16.mxu0 %v121
  %281 = vmatmul.mubr.bf16.gmra.mrb[0].mxu0 %v120
  %v282 = vpop.f32.mrb[0].mxu0
  %v283 = vadd.f32 %v70, %v282
  %v284 = vpop.f32.mrb[0].mxu0
  %v285 = vpop.f32.mrb[0].mxu0
  %v286 = vadd.f32 %v70, %v285
  %v287 = vpop.f32.mrb[0].mxu0
  %288 = vmatprep.mubr.bf16.mxu0 %v123
  %289 = vmatmul.mubr.bf16.gmra.mrb[0].mxu0 %v122
  %v290 = vpop.f32.mrb[0].mxu0
  %v291 = vadd.f32 %v70, %v290
  %v292 = vpop.f32.mrb[0].mxu0
  %v293 = vpop.f32.mrb[0].mxu0
  %v294 = vadd.f32 %v70, %v293
  %v295 = vpop.f32.mrb[0].mxu0
  %296 = vmatprep.mubr.bf16.mxu0 %v125
  %297 = vmatmul.mubr.bf16.gmra.mrb[0].mxu0 %v124
  %v298 = vpop.f32.mrb[0].mxu0
  %v299 = vadd.f32 %v70, %v298
  %v300 = vpop.f32.mrb[0].mxu0
  %v301 = vpop.f32.mrb[0].mxu0
  %v302 = vadd.f32 %v70, %v301
  %v303 = vpop.f32.mrb[0].mxu0
  %304 = vmatprep.mubr.bf16.mxu0 %v127
  %305 = vmatmul.mubr.bf16.gmra.mrb[0].mxu0 %v126
  %v306 = vpop.f32.mrb[0].mxu0
  %v307 = vadd.f32 %v70, %v306
  %v308 = vpop.f32.mrb[0].mxu0
  %v309 = vpop.f32.mrb[0].mxu0
  %v310 = vadd.f32 %v70, %v309
  %v311 = vpop.f32.mrb[0].mxu0
  %312 = vmatprep.mubr.bf16.mxu0 %v129
  %313 = vmatmul.mubr.bf16.gmra.mrb[0].mxu0 %v128
  %v314 = vpop.f32.mrb[0].mxu0
  %v315 = vadd.f32 %v70, %v314
  %v316 = vpop.f32.mrb[0].mxu0
  %v317 = vpop.f32.mrb[0].mxu0
  %v318 = vadd.f32 %v70, %v317
  %v319 = vpop.f32.mrb[0].mxu0
  %320 = vmatprep.mubr.bf16.mxu0 %v131
  %321 = vmatmul.mubr.bf16.gmra.mrb[0].mxu0 %v130
  %v322 = vpop.f32.mrb[0].mxu0
  %v323 = vadd.f32 %v70, %v322
  %v324 = vpop.f32.mrb[0].mxu0
  %v325 = vpop.f32.mrb[0].mxu0
  %v326 = vadd.f32 %v70, %v325
  %v327 = vpop.f32.mrb[0].mxu0
  %328 = vmatprep.mubr.bf16.mxu0 %v133
  %329 = vmatmul.mubr.bf16.gmra.mrb[0].mxu0 %v132
  %v330 = vpop.f32.mrb[0].mxu0
  %v331 = vadd.f32 %v70, %v330
  %v332 = vpop.f32.mrb[0].mxu0
  %v333 = vpop.f32.mrb[0].mxu0
  %v334 = vadd.f32 %v70, %v333
  %v335 = vpop.f32.mrb[0].mxu0
  %336 = vmatprep.mubr.bf16.mxu0 %v135
  %337 = vmatmul.mubr.bf16.gmra.mrb[0].mxu0 %v134
  %v338 = vpop.f32.mrb[0].mxu0
  %v339 = vadd.f32 %v70, %v338
  %v340 = vpop.f32.mrb[0].mxu0
  %v341 = vpop.f32.mrb[0].mxu0
  %v342 = vadd.f32 %v70, %v341
  %v343 = vpop.f32.mrb[0].mxu0
  %344 = vdwg.mxu0
  %v345 = vpack.c.bf16 %v286, %v283
  %v346 = vpack.c.bf16 %v294, %v291
  %v347 = vpack.c.bf16 %v302, %v299
  %v348 = vpack.c.bf16 %v310, %v307
  %v349 = vpack.c.bf16 %v318, %v315
  %v350 = vpack.c.bf16 %v326, %v323
  %v351 = vpack.c.bf16 %v334, %v331
  %v352 = vpack.c.bf16 %v342, %v339
  %v361 = vunpack.c.l.b16 %v345
  %v362 = vunpack.c.h.b16 %v345
  %v363 = vunpack.c.l.b16 %v346
  %v364 = vunpack.c.h.b16 %v346
  %v365 = vunpack.c.l.b16 %v347
  %v366 = vunpack.c.h.b16 %v347
  %v367 = vunpack.c.l.b16 %v348
  %v368 = vunpack.c.h.b16 %v348
  %v369 = vunpack.c.l.b16 %v349
  %v370 = vunpack.c.h.b16 %v349
  %v371 = vunpack.c.l.b16 %v350
  %v372 = vunpack.c.h.b16 %v350
  %v373 = vunpack.c.l.b16 %v351
  %v374 = vunpack.c.h.b16 %v351
  %v375 = vunpack.c.l.b16 %v352
  %v376 = vunpack.c.h.b16 %v352
  %v377 = vpack.c.b16 %v361, %v361
  %v378 = vpack.c.b16 %v362, %v362
  %v379 = vpack.c.b16 %v363, %v363
  %v380 = vpack.c.b16 %v364, %v364
  %v381 = vpack.c.b16 %v365, %v365
  %v382 = vpack.c.b16 %v366, %v366
  %v383 = vpack.c.b16 %v367, %v367
  %v384 = vpack.c.b16 %v368, %v368
  %v385 = vpack.c.b16 %v369, %v369
  %v386 = vpack.c.b16 %v370, %v370
  %v387 = vpack.c.b16 %v371, %v371
  %v388 = vpack.c.b16 %v372, %v372
  %v389 = vpack.c.b16 %v373, %v373
  %v390 = vpack.c.b16 %v374, %v374
  %v391 = vpack.c.b16 %v375, %v375
  %v392 = vpack.c.b16 %v376, %v376
  %409 = vst [vmem:[%s3] sm:$0xf] %v377
  %410 = vst [vmem:[%s3 + $0x4] sm:$0xf] %v378
  %411 = vst [vmem:[%s3 + $0x8] sm:$0xf] %v379
  %412 = vst [vmem:[%s3 + $0xc] sm:$0xf] %v380
  %413 = vst [vmem:[%s3 + $0x10] sm:$0xf] %v381
  %414 = vst [vmem:[%s3 + $0x14] sm:$0xf] %v382
  %415 = vst [vmem:[%s3 + $0x18] sm:$0xf] %v383
  %416 = vst [vmem:[%s3 + $0x1c] sm:$0xf] %v384
  %417 = vst [vmem:[%s3 + $0x20] sm:$0xf] %v385
  %418 = vst [vmem:[%s3 + $0x24] sm:$0xf] %v386
  %419 = vst [vmem:[%s3 + $0x28] sm:$0xf] %v387
  %420 = vst [vmem:[%s3 + $0x2c] sm:$0xf] %v388
  %421 = vst [vmem:[%s3 + $0x30] sm:$0xf] %v389
  %422 = vst [vmem:[%s3 + $0x34] sm:$0xf] %v390
  %423 = vst [vmem:[%s3 + $0x38] sm:$0xf] %v391
  %424 = vst [vmem:[%s3 + $0x3c] sm:$0xf] %v392
  %v425 = vadd.f32 %v283, %v286
  %v426 = vadd.f32 %v425, %v291
  %v427 = vadd.f32 %v426, %v294
  %v428 = vadd.f32 %v427, %v299
  %v429 = vadd.f32 %v428, %v302
  %v430 = vadd.f32 %v429, %v307
  %v431 = vadd.f32 %v430, %v310
  %v432 = vadd.f32 %v431, %v315
  %v433 = vadd.f32 %v432, %v318
  %v434 = vadd.f32 %v433, %v323
  %v435 = vadd.f32 %v434, %v326
  %v436 = vadd.f32 %v435, %v331
  %v437 = vadd.f32 %v436, %v334
  %v438 = vadd.f32 %v437, %v339
  %v439 = vadd.f32 %v438, %v342
  %v440 = vrot.slane %v439, 4
  %v441 = vadd.f32 %v439, %v440
  %v442 = vrot.slane %v441, 2
  %v443 = vadd.f32 %v441, %v442
  %v444 = vrot.slane %v443, 1
  %v445 = vadd.f32 %v443, %v444
  %v446 = vmul.f32 %v283, %v283
  %v447 = vmul.f32 %v286, %v286
  %v448 = vmul.f32 %v291, %v291
  %v449 = vmul.f32 %v294, %v294
  %v450 = vmul.f32 %v299, %v299
  %v451 = vmul.f32 %v302, %v302
  %v452 = vmul.f32 %v307, %v307
  %v453 = vmul.f32 %v310, %v310
  %v454 = vmul.f32 %v315, %v315
  %v455 = vmul.f32 %v318, %v318
  %v456 = vmul.f32 %v323, %v323
  %v457 = vmul.f32 %v326, %v326
  %v458 = vmul.f32 %v331, %v331
  %v459 = vmul.f32 %v334, %v334
  %v460 = vmul.f32 %v339, %v339
  %v461 = vmul.f32 %v342, %v342
  %v462 = vadd.f32 %v446, %v447
  %v463 = vadd.f32 %v462, %v448
  %v464 = vadd.f32 %v463, %v449
  %v465 = vadd.f32 %v464, %v450
  %v466 = vadd.f32 %v465, %v451
  %v467 = vadd.f32 %v466, %v452
  %v468 = vadd.f32 %v467, %v453
  %v469 = vadd.f32 %v468, %v454
  %v470 = vadd.f32 %v469, %v455
  %v471 = vadd.f32 %v470, %v456
  %v472 = vadd.f32 %v471, %v457
  %v473 = vadd.f32 %v472, %v458
  %v474 = vadd.f32 %v473, %v459
  %v475 = vadd.f32 %v474, %v460
  %v476 = vadd.f32 %v475, %v461
  %v477 = vrot.slane %v476, 4
  %v478 = vadd.f32 %v476, %v477
  %v479 = vrot.slane %v478, 2
  %v480 = vadd.f32 %v478, %v479
  %v481 = vrot.slane %v480, 1
  %v482 = vadd.f32 %v480, %v481
  %483 = vst [vmem:[%s4] sm:$0x1] %v445
  %484 = vst [vmem:[%s4 + $0x1] sm:$0x1] %v482
  %485 = vst [vmem:[%s4 + $0x2] sm:$0x3f] 0.0
  // Predicated region
  $region14: #{resblock_forward.5} parent=0 // pred_check
    _
  $region15: #{resblock_forward.5} parent=0 // pred_check_branch
    %487 = sbr.rel (0) target = $region17
  $region16: #{resblock_forward.5} parent=0 // pred_region
    _
  $region17: #{resblock_forward.5} parent=0 // pred_fallthru
    _
  // Predicated region
  $region18: #{resblock_forward.5} parent=0 // pred_check
    _
  $region19: #{resblock_forward.5} parent=0 // pred_check_branch
    %489 = sbr.rel (0) target = $region21
  $region20: #{resblock_forward.5} parent=0 // pred_region
    _
  $region21: #{resblock_forward.5} parent=0 // pred_fallthru
    _
  // Predicated region
  $region22: #{resblock_forward.5} parent=0 // pred_check
    _
  $region23: #{resblock_forward.5} parent=0 // pred_check_branch
    %491 = sbr.rel (0) target = $region25
  $region24: #{resblock_forward.5} parent=0 // pred_region
    _
  $region25: #{resblock_forward.5} parent=0 // pred_fallthru
    _
  // Predicated region
  $region26: #{resblock_forward.5} parent=0 // pred_check
    _
  $region27: #{resblock_forward.5} parent=0 // pred_check_branch
    %493 = sbr.rel (0) target = $region29
  $region28: #{resblock_forward.5} parent=0 // pred_region
    _
  $region29: #{resblock_forward.5} parent=0 // pred_fallthru
    _

// kernel: resblock_forward.7
$region0: #{resblock_forward.7}
  #allocation0 [shape = 'u32[]', space=smem, size = 0x4, offset = 0x4, fixed_abs, tag = 'smem constant byte address 0x4 - core index']
  #allocation1 [shape = 'u32[144,128]{1,0:T(1,128)}', space=vmem, size = 0x12000, scoped, tag = 'internal scratch']
  %s0 = inlined_call_operand.vmem [shape: bf16[128,384], index: 0, kind: input, shape index: {}]
  %s1 = inlined_call_operand.vmem [shape: bf16[384,128], index: 1, kind: input, shape index: {}]
  %s2 = inlined_call_operand.vmem [shape: f32[1,128], index: 2, kind: input, shape index: {}]
  %s3 = inlined_call_operand.vmem [shape: bf16[128,128], index: 3, kind: output, shape index: {0}]
  %s4 = inlined_call_operand.vmem [shape: f32[8,128], index: 4, kind: output, shape index: {1}]
  %5 = xla_tuple %s3, %s4
  %s6 = sld [smem:[#allocation0]]
  $region30: #{resblock_forward.7} parent=0
    _
  %s8 = ssub.s32 1, %s6
  %s9 = scalar_select 0, %s8, %s6
  // Predicated region
  $region2: #{resblock_forward.7} parent=0 // pred_check
    _
  $region3: #{resblock_forward.7} parent=0 // pred_check_branch
    %11 = sbr.rel (0) target = $region5
  $region4: #{resblock_forward.7} parent=0 // pred_region
    _
  $region5: #{resblock_forward.7} parent=0 // pred_fallthru
    _
  // Predicated region
  $region6: #{resblock_forward.7} parent=0 // pred_check
    _
  $region7: #{resblock_forward.7} parent=0 // pred_check_branch
    %13 = sbr.rel (0) target = $region9
  $region8: #{resblock_forward.7} parent=0 // pred_region
    _
  $region9: #{resblock_forward.7} parent=0 // pred_fallthru
    _
  // Predicated region
  $region10: #{resblock_forward.7} parent=0 // pred_check
    _
  $region11: #{resblock_forward.7} parent=0 // pred_check_branch
    %15 = sbr.rel (0) target = $region13
  $region12: #{resblock_forward.7} parent=0 // pred_region
    _
  $region13: #{resblock_forward.7} parent=0 // pred_fallthru
    _
  %v17 = vld [vmem:[%s0] sm:$0xff]
  %v18 = vld [vmem:[%s0 + $0x8] sm:$0xf]
  %v19 = vld [vmem:[%s0 + $0xc] sm:$0xff]
  %v20 = vld [vmem:[%s0 + $0x14] sm:$0xf]
  %v21 = vld [vmem:[%s0 + $0x18] sm:$0xff]
  %v22 = vld [vmem:[%s0 + $0x20] sm:$0xf]
  %v23 = vld [vmem:[%s0 + $0x24] sm:$0xff]
  %v24 = vld [vmem:[%s0 + $0x2c] sm:$0xf]
  %v25 = vld [vmem:[%s0 + $0x30] sm:$0xff]
  %v26 = vld [vmem:[%s0 + $0x38] sm:$0xf]
  %v27 = vld [vmem:[%s0 + $0x3c] sm:$0xff]
  %v28 = vld [vmem:[%s0 + $0x44] sm:$0xf]
  %v29 = vld [vmem:[%s0 + $0x48] sm:$0xff]
  %v30 = vld [vmem:[%s0 + $0x50] sm:$0xf]
  %v31 = vld [vmem:[%s0 + $0x54] sm:$0xff]
  %v32 = vld [vmem:[%s0 + $0x5c] sm:$0xf]
  %v33 = vld [vmem:[%s0 + $0x60] sm:$0xff]
  %v34 = vld [vmem:[%s0 + $0x68] sm:$0xf]
  %v35 = vld [vmem:[%s0 + $0x6c] sm:$0xff]
  %v36 = vld [vmem:[%s0 + $0x74] sm:$0xf]
  %v37 = vld [vmem:[%s0 + $0x78] sm:$0xff]
  %v38 = vld [vmem:[%s0 + $0x80] sm:$0xf]
  %v39 = vld [vmem:[%s0 + $0x84] sm:$0xff]
  %v40 = vld [vmem:[%s0 + $0x8c] sm:$0xf]
  %v41 = vld [vmem:[%s0 + $0x90] sm:$0xff]
  %v42 = vld [vmem:[%s0 + $0x98] sm:$0xf]
  %v43 = vld [vmem:[%s0 + $0x9c] sm:$0xff]
  %v44 = vld [vmem:[%s0 + $0xa4] sm:$0xf]
  %v45 = vld [vmem:[%s0 + $0xa8] sm:$0xff]
  %v46 = vld [vmem:[%s0 + $0xb0] sm:$0xf]
  %v47 = vld [vmem:[%s0 + $0xb4] sm:$0xff]
  %v48 = vld [vmem:[%s0 + $0xbc] sm:$0xf]
  %v49 = vld [vmem:[%s1] sm:$0xf]
  %v50 = vld [vmem:[%s1 + $0x4] sm:$0xf]
  %v51 = vld [vmem:[%s1 + $0x8] sm:$0xf]
  %v52 = vld [vmem:[%s1 + $0xc] sm:$0xf]
  %v53 = vld [vmem:[%s1 + $0x10] sm:$0xf]
  %v54 = vld [vmem:[%s1 + $0x14] sm:$0xf]
  %v55 = vld [vmem:[%s1 + $0x18] sm:$0xf]
  %v56 = vld [vmem:[%s1 + $0x1c] sm:$0xf]
  %v57 = vld [vmem:[%s1 + $0x20] sm:$0xf]
  %v58 = vld [vmem:[%s1 + $0x24] sm:$0xf]
  %v59 = vld [vmem:[%s1 + $0x28] sm:$0xf]
  %v60 = vld [vmem:[%s1 + $0x2c] sm:$0xf]
  %v61 = vld [vmem:[%s1 + $0x30] sm:$0xf]
  %v62 = vld [vmem:[%s1 + $0x34] sm:$0xf]
  %v63 = vld [vmem:[%s1 + $0x38] sm:$0xf]
  %v64 = vld [vmem:[%s1 + $0x3c] sm:$0xf]
  %v65 = vld [vmem:[%s1 + $0x40] sm:$0xf]
  %v66 = vld [vmem:[%s1 + $0x44] sm:$0xf]
  %v67 = vld [vmem:[%s1 + $0x48] sm:$0xf]
  %v68 = vld [vmem:[%s1 + $0x4c] sm:$0xf]
  %v69 = vld [vmem:[%s1 + $0x50] sm:$0xf]
  %v70 = vld [vmem:[%s1 + $0x54] sm:$0xf]
  %v71 = vld [vmem:[%s1 + $0x58] sm:$0xf]
  %v72 = vld [vmem:[%s1 + $0x5c] sm:$0xf]
  %v73 = vld [vmem:[%s1 + $0x60] sm:$0xf]
  %v74 = vld [vmem:[%s1 + $0x64] sm:$0xf]
  %v75 = vld [vmem:[%s1 + $0x68] sm:$0xf]
  %v76 = vld [vmem:[%s1 + $0x6c] sm:$0xf]
  %v77 = vld [vmem:[%s1 + $0x70] sm:$0xf]
  %v78 = vld [vmem:[%s1 + $0x74] sm:$0xf]
  %v79 = vld [vmem:[%s1 + $0x78] sm:$0xf]
  %v80 = vld [vmem:[%s1 + $0x7c] sm:$0xf]
  %v81 = vld [vmem:[%s1 + $0x80] sm:$0xf]
  %v82 = vld [vmem:[%s1 + $0x84] sm:$0xf]
  %v83 = vld [vmem:[%s1 + $0x88] sm:$0xf]
  %v84 = vld [vmem:[%s1 + $0x8c] sm:$0xf]
  %v85 = vld [vmem:[%s1 + $0x90] sm:$0xf]
  %v86 = vld [vmem:[%s1 + $0x94] sm:$0xf]
  %v87 = vld [vmem:[%s1 + $0x98] sm:$0xf]
  %v88 = vld [vmem:[%s1 + $0x9c] sm:$0xf]
  %v89 = vld [vmem:[%s1 + $0xa0] sm:$0xf]
  %v90 = vld [vmem:[%s1 + $0xa4] sm:$0xf]
  %v91 = vld [vmem:[%s1 + $0xa8] sm:$0xf]
  %v92 = vld [vmem:[%s1 + $0xac] sm:$0xf]
  %v93 = vld [vmem:[%s1 + $0xb0] sm:$0xf]
  %v94 = vld [vmem:[%s1 + $0xb4] sm:$0xf]
  %v95 = vld [vmem:[%s1 + $0xb8] sm:$0xf]
  %v96 = vld [vmem:[%s1 + $0xbc] sm:$0xf]
  %v97 = vld [vmem:[%s2] sm:$0x1]
  %v99 = vlaneseq
  %v100 = vshrl.u32 %v99, 7
  %v101 = vsub.s32 0, %v100
  %v102 = vrot.slane %v97, %v101
  %v136 = vunpack.c.l.b16 %v17
  %v137 = vunpack.c.h.b16 %v17
  %v138 = vunpack.c.l.b16 %v18
  %v139 = vunpack.c.l.b16 %v19
  %v140 = vunpack.c.h.b16 %v19
  %v141 = vunpack.c.l.b16 %v20
  %v142 = vunpack.c.l.b16 %v21
  %v143 = vunpack.c.h.b16 %v21
  %v144 = vunpack.c.l.b16 %v22
  %v145 = vunpack.c.l.b16 %v23
  %v146 = vunpack.c.h.b16 %v23
  %v147 = vunpack.c.l.b16 %v24
  %v148 = vunpack.c.l.b16 %v25
  %v149 = vunpack.c.h.b16 %v25
  %v150 = vunpack.c.l.b16 %v26
  %v151 = vunpack.c.l.b16 %v27
  %v152 = vunpack.c.h.b16 %v27
  %v153 = vunpack.c.l.b16 %v28
  %v154 = vunpack.c.l.b16 %v29
  %v155 = vunpack.c.h.b16 %v29
  %v156 = vunpack.c.l.b16 %v30
  %v157 = vunpack.c.l.b16 %v31
  %v158 = vunpack.c.h.b16 %v31
  %v159 = vunpack.c.l.b16 %v32
  %v160 = vunpack.c.l.b16 %v33
  %v161 = vunpack.c.h.b16 %v33
  %v162 = vunpack.c.l.b16 %v34
  %v163 = vunpack.c.l.b16 %v35
  %v164 = vunpack.c.h.b16 %v35
  %v165 = vunpack.c.l.b16 %v36
  %v166 = vunpack.c.l.b16 %v37
  %v167 = vunpack.c.h.b16 %v37
  %v168 = vunpack.c.l.b16 %v38
  %v169 = vunpack.c.l.b16 %v39
  %v170 = vunpack.c.h.b16 %v39
  %v171 = vunpack.c.l.b16 %v40
  %v172 = vunpack.c.l.b16 %v41
  %v173 = vunpack.c.h.b16 %v41
  %v174 = vunpack.c.l.b16 %v42
  %v175 = vunpack.c.l.b16 %v43
  %v176 = vunpack.c.h.b16 %v43
  %v177 = vunpack.c.l.b16 %v44
  %v178 = vunpack.c.l.b16 %v45
  %v179 = vunpack.c.h.b16 %v45
  %v180 = vunpack.c.l.b16 %v46
  %v181 = vunpack.c.l.b16 %v47
  %v182 = vunpack.c.h.b16 %v47
  %v183 = vunpack.c.l.b16 %v48
  %v184 = vpack.c.b16 %v139, %v136
  %v185 = vpack.c.b16 %v140, %v137
  %v186 = vpack.c.b16 %v141, %v138
  %v187 = vpack.c.b16 %v145, %v142
  %v188 = vpack.c.b16 %v146, %v143
  %v189 = vpack.c.b16 %v147, %v144
  %v190 = vpack.c.b16 %v151, %v148
  %v191 = vpack.c.b16 %v152, %v149
  %v192 = vpack.c.b16 %v153, %v150
  %v193 = vpack.c.b16 %v157, %v154
  %v194 = vpack.c.b16 %v158, %v155
  %v195 = vpack.c.b16 %v159, %v156
  %v196 = vpack.c.b16 %v163, %v160
  %v197 = vpack.c.b16 %v164, %v161
  %v198 = vpack.c.b16 %v165, %v162
  %v199 = vpack.c.b16 %v169, %v166
  %v200 = vpack.c.b16 %v170, %v167
  %v201 = vpack.c.b16 %v171, %v168
  %v202 = vpack.c.b16 %v175, %v172
  %v203 = vpack.c.b16 %v176, %v173
  %v204 = vpack.c.b16 %v177, %v174
  %v205 = vpack.c.b16 %v181, %v178
  %v206 = vpack.c.b16 %v182, %v179
  %v207 = vpack.c.b16 %v183, %v180
  %v280 = vunpack.c.l.b16 %v49
  %v281 = vunpack.c.l.b16 %v50
  %v282 = vunpack.c.l.b16 %v51
  %v283 = vunpack.c.l.b16 %v52
  %v284 = vunpack.c.l.b16 %v53
  %v285 = vunpack.c.l.b16 %v54
  %v286 = vunpack.c.l.b16 %v55
  %v287 = vunpack.c.l.b16 %v56
  %v288 = vunpack.c.l.b16 %v57
  %v289 = vunpack.c.l.b16 %v58
  %v290 = vunpack.c.l.b16 %v59
  %v291 = vunpack.c.l.b16 %v60
  %v292 = vunpack.c.l.b16 %v61
  %v293 = vunpack.c.l.b16 %v62
  %v294 = vunpack.c.l.b16 %v63
  %v295 = vunpack.c.l.b16 %v64
  %v296 = vunpack.c.l.b16 %v65
  %v297 = vunpack.c.l.b16 %v66
  %v298 = vunpack.c.l.b16 %v67
  %v299 = vunpack.c.l.b16 %v68
  %v300 = vunpack.c.l.b16 %v69
  %v301 = vunpack.c.l.b16 %v70
  %v302 = vunpack.c.l.b16 %v71
  %v303 = vunpack.c.l.b16 %v72
  %v304 = vunpack.c.l.b16 %v73
  %v305 = vunpack.c.l.b16 %v74
  %v306 = vunpack.c.l.b16 %v75
  %v307 = vunpack.c.l.b16 %v76
  %v308 = vunpack.c.l.b16 %v77
  %v309 = vunpack.c.l.b16 %v78
  %v310 = vunpack.c.l.b16 %v79
  %v311 = vunpack.c.l.b16 %v80
  %v312 = vunpack.c.l.b16 %v81
  %v313 = vunpack.c.l.b16 %v82
  %v314 = vunpack.c.l.b16 %v83
  %v315 = vunpack.c.l.b16 %v84
  %v316 = vunpack.c.l.b16 %v85
  %v317 = vunpack.c.l.b16 %v86
  %v318 = vunpack.c.l.b16 %v87
  %v319 = vunpack.c.l.b16 %v88
  %v320 = vunpack.c.l.b16 %v89
  %v321 = vunpack.c.l.b16 %v90
  %v322 = vunpack.c.l.b16 %v91
  %v323 = vunpack.c.l.b16 %v92
  %v324 = vunpack.c.l.b16 %v93
  %v325 = vunpack.c.l.b16 %v94
  %v326 = vunpack.c.l.b16 %v95
  %v327 = vunpack.c.l.b16 %v96
  %v328 = vpack.c.b16 %v281, %v280
  %v329 = vpack.c.b16 %v283, %v282
  %v330 = vpack.c.b16 %v285, %v284
  %v331 = vpack.c.b16 %v287, %v286
  %v332 = vpack.c.b16 %v289, %v288
  %v333 = vpack.c.b16 %v291, %v290
  %v334 = vpack.c.b16 %v293, %v292
  %v335 = vpack.c.b16 %v295, %v294
  %v336 = vpack.c.b16 %v297, %v296
  %v337 = vpack.c.b16 %v299, %v298
  %v338 = vpack.c.b16 %v301, %v300
  %v339 = vpack.c.b16 %v303, %v302
  %v340 = vpack.c.b16 %v305, %v304
  %v341 = vpack.c.b16 %v307, %v306
  %v342 = vpack.c.b16 %v309, %v308
  %v343 = vpack.c.b16 %v311, %v310
  %v344 = vpack.c.b16 %v313, %v312
  %v345 = vpack.c.b16 %v315, %v314
  %v346 = vpack.c.b16 %v317, %v316
  %v347 = vpack.c.b16 %v319, %v318
  %v348 = vpack.c.b16 %v321, %v320
  %v349 = vpack.c.b16 %v323, %v322
  %v350 = vpack.c.b16 %v325, %v324
  %v351 = vpack.c.b16 %v327, %v326
  %376 = vmatprep.subr.bf16.mxu0 0
  %377 = vmatpush1.bf16.msra.mxu0 %v328
  %378 = vmatprep.subr.bf16.mxu0 0
  %379 = vmatpush1.bf16.msra.mxu0 %v329
  %380 = vmatprep.subr.bf16.mxu0 0
  %381 = vmatpush1.bf16.msra.mxu0 %v330
  %382 = vmatprep.subr.bf16.mxu0 0
  %383 = vmatpush1.bf16.msra.mxu0 %v331
  %384 = vmatprep.subr.bf16.mxu0 0
  %385 = vmatpush1.bf16.msra.mxu0 %v332
  %386 = vmatprep.subr.bf16.mxu0 0
  %387 = vmatpush1.bf16.msra.mxu0 %v333
  %388 = vmatprep.subr.bf16.mxu0 0
  %389 = vmatpush1.bf16.msra.mxu0 %v334
  %390 = vmatprep.subr.bf16.mxu0 0
  %391 = vmatpush1.bf16.msra.mxu0 %v335
  %392 = vmatprep.subr.bf16.mxu0 0
  %393 = vmatpush1.bf16.msra.mxu0 %v336
  %394 = vmatprep.subr.bf16.mxu0 0
  %395 = vmatpush1.bf16.msra.mxu0 %v337
  %396 = vmatprep.subr.bf16.mxu0 0
  %397 = vmatpush1.bf16.msra.mxu0 %v338
  %398 = vmatprep.subr.bf16.mxu0 0
  %399 = vmatpush1.bf16.msra.mxu0 %v339
  %400 = vmatprep.subr.bf16.mxu0 0
  %401 = vmatpush1.bf16.msra.mxu0 %v340
  %402 = vmatprep.subr.bf16.mxu0 0
  %403 = vmatpush1.bf16.msra.mxu0 %v341
  %404 = vmatprep.subr.bf16.mxu0 0
  %405 = vmatpush1.bf16.msra.mxu0 %v342
  %406 = vmatprep.subr.bf16.mxu0 0
  %407 = vmatpush1.bf16.msra.mxu0 %v343
  %408 = vmatprep.mubr.bf16.mxu0 %v185
  %409 = vmatmul.mubr.bf16.gmra.mrb[0].mxu0 %v184
  %v410 = vpop.f32.mrb[0].mxu0
  %v411 = vadd.f32 %v102, %v410
  %v412 = vpop.f32.mrb[0].mxu0
  %v413 = vpop.f32.mrb[0].mxu0
  %v414 = vadd.f32 %v102, %v413
  %v415 = vpop.f32.mrb[0].mxu0
  %416 = vmatprep.mubr.bf16.mxu0 %v188
  %417 = vmatmul.mubr.bf16.gmra.mrb[0].mxu0 %v187
  %v418 = vpop.f32.mrb[0].mxu0
  %v419 = vadd.f32 %v102, %v418
  %v420 = vpop.f32.mrb[0].mxu0
  %v421 = vpop.f32.mrb[0].mxu0
  %v422 = vadd.f32 %v102, %v421
  %v423 = vpop.f32.mrb[0].mxu0
  %424 = vmatprep.mubr.bf16.mxu0 %v191
  %425 = vmatmul.mubr.bf16.gmra.mrb[0].mxu0 %v190
  %v426 = vpop.f32.mrb[0].mxu0
  %v427 = vadd.f32 %v102, %v426
  %v428 = vpop.f32.mrb[0].mxu0
  %v429 = vpop.f32.mrb[0].mxu0
  %v430 = vadd.f32 %v102, %v429
  %v431 = vpop.f32.mrb[0].mxu0
  %432 = vmatprep.mubr.bf16.mxu0 %v194
  %433 = vmatmul.mubr.bf16.gmra.mrb[0].mxu0 %v193
  %v434 = vpop.f32.mrb[0].mxu0
  %v435 = vadd.f32 %v102, %v434
  %v436 = vpop.f32.mrb[0].mxu0
  %v437 = vpop.f32.mrb[0].mxu0
  %v438 = vadd.f32 %v102, %v437
  %v439 = vpop.f32.mrb[0].mxu0
  %440 = vmatprep.mubr.bf16.mxu0 %v197
  %441 = vmatmul.mubr.bf16.gmra.mrb[0].mxu0 %v196
  %v442 = vpop.f32.mrb[0].mxu0
  %v443 = vadd.f32 %v102, %v442
  %v444 = vpop.f32.mrb[0].mxu0
  %v445 = vpop.f32.mrb[0].mxu0
  %v446 = vadd.f32 %v102, %v445
  %v447 = vpop.f32.mrb[0].mxu0
  %448 = vmatprep.mubr.bf16.mxu0 %v200
  %449 = vmatmul.mubr.bf16.gmra.mrb[0].mxu0 %v199
  %v450 = vpop.f32.mrb[0].mxu0
  %v451 = vadd.f32 %v102, %v450
  %v452 = vpop.f32.mrb[0].mxu0
  %v453 = vpop.f32.mrb[0].mxu0
  %v454 = vadd.f32 %v102, %v453
  %v455 = vpop.f32.mrb[0].mxu0
  %456 = vmatprep.mubr.bf16.mxu0 %v203
  %457 = vmatmul.mubr.bf16.gmra.mrb[0].mxu0 %v202
  %v458 = vpop.f32.mrb[0].mxu0
  %v459 = vadd.f32 %v102, %v458
  %v460 = vpop.f32.mrb[0].mxu0
  %v461 = vpop.f32.mrb[0].mxu0
  %v462 = vadd.f32 %v102, %v461
  %v463 = vpop.f32.mrb[0].mxu0
  %464 = vmatprep.mubr.bf16.mxu0 %v206
  %465 = vmatmul.mubr.bf16.gmra.mrb[0].mxu0 %v205
  %v466 = vpop.f32.mrb[0].mxu0
  %v467 = vadd.f32 %v102, %v466
  %v468 = vpop.f32.mrb[0].mxu0
  %v469 = vpop.f32.mrb[0].mxu0
  %v470 = vadd.f32 %v102, %v469
  %v471 = vpop.f32.mrb[0].mxu0
  %472 = vdwg.mxu0
  %473 = vmatprep.subr.bf16.mxu0 0
  %474 = vmatpush1.bf16.msra.mxu0 %v344
  %475 = vmatprep.subr.bf16.mxu0 0
  %476 = vmatpush1.bf16.msra.mxu0 %v345
  %477 = vmatprep.subr.bf16.mxu0 0
  %478 = vmatpush1.bf16.msra.mxu0 %v346
  %479 = vmatprep.subr.bf16.mxu0 0
  %480 = vmatpush1.bf16.msra.mxu0 %v347
  %481 = vmatprep.subr.bf16.mxu0 0
  %482 = vmatpush1.bf16.msra.mxu0 %v348
  %483 = vmatprep.subr.bf16.mxu0 0
  %484 = vmatpush1.bf16.msra.mxu0 %v349
  %485 = vmatprep.subr.bf16.mxu0 0
  %486 = vmatpush1.bf16.msra.mxu0 %v350
  %487 = vmatprep.subr.bf16.mxu0 0
  %488 = vmatpush1.bf16.msra.mxu0 %v351
  %489 = vmatprep.subr.bf16.mxu0 0
  %490 = vmatpush1.bf16.msra.mxu0 0
  %491 = vmatprep.subr.bf16.mxu0 0
  %492 = vmatpush1.bf16.msra.mxu0 0
  %493 = vmatprep.subr.bf16.mxu0 0
  %494 = vmatpush1.bf16.msra.mxu0 0
  %495 = vmatprep.subr.bf16.mxu0 0
  %496 = vmatpush1.bf16.msra.mxu0 0
  %497 = vmatprep.subr.bf16.mxu0 0
  %498 = vmatpush1.bf16.msra.mxu0 0
  %499 = vmatprep.subr.bf16.mxu0 0
  %500 = vmatpush1.bf16.msra.mxu0 0
  %501 = vmatprep.subr.bf16.mxu0 0
  %502 = vmatpush1.bf16.msra.mxu0 0
  %503 = vmatprep.subr.bf16.mxu0 0
  %504 = vmatpush1.bf16.msra.mxu0 0
  %505 = vmatprep.mubr.bf16.mxu0 0
  %506 = vmatmul.mubr.bf16.gmra.mrb[0].mxu0 %v186
  %v507 = vpop.f32.mrb[0].mxu0
  %v508 = vadd.f32 %v411, %v507
  %v509 = vpop.f32.mrb[0].mxu0
  %v510 = vpop.f32.mrb[0].mxu0
  %v511 = vadd.f32 %v414, %v510
  %v512 = vpop.f32.mrb[0].mxu0
  %513 = vmatprep.mubr.bf16.mxu0 0
  %514 = vmatmul.mubr.bf16.gmra.mrb[0].mxu0 %v189
  %v515 = vpop.f32.mrb[0].mxu0
  %v516 = vadd.f32 %v419, %v515
  %v517 = vpop.f32.mrb[0].mxu0
  %v518 = vpop.f32.mrb[0].mxu0
  %v519 = vadd.f32 %v422, %v518
  %v520 = vpop.f32.mrb[0].mxu0
  %521 = vmatprep.mubr.bf16.mxu0 0
  %522 = vmatmul.mubr.bf16.gmra.mrb[0].mxu0 %v192
  %v523 = vpop.f32.mrb[0].mxu0
  %v524 = vadd.f32 %v427, %v523
  %v525 = vpop.f32.mrb[0].mxu0
  %v526 = vpop.f32.mrb[0].mxu0
  %v527 = vadd.f32 %v430, %v526
  %v528 = vpop.f32.mrb[0].mxu0
  %529 = vmatprep.mubr.bf16.mxu0 0
  %530 = vmatmul.mubr.bf16.gmra.mrb[0].mxu0 %v195
  %v531 = vpop.f32.mrb[0].mxu0
  %v532 = vadd.f32 %v435, %v531
  %v533 = vpop.f32.mrb[0].mxu0
  %v534 = vpop.f32.mrb[0].mxu0
  %v535 = vadd.f32 %v438, %v534
  %v536 = vpop.f32.mrb[0].mxu0
  %537 = vmatprep.mubr.bf16.mxu0 0
  %538 = vmatmul.mubr.bf16.gmra.mrb[0].mxu0 %v198
  %v539 = vpop.f32.mrb[0].mxu0
  %v540 = vadd.f32 %v443, %v539
  %v541 = vpop.f32.mrb[0].mxu0
  %v542 = vpop.f32.mrb[0].mxu0
  %v543 = vadd.f32 %v446, %v542
  %v544 = vpop.f32.mrb[0].mxu0
  %545 = vmatprep.mubr.bf16.mxu0 0
  %546 = vmatmul.mubr.bf16.gmra.mrb[0].mxu0 %v201
  %v547 = vpop.f32.mrb[0].mxu0
  %v548 = vadd.f32 %v451, %v547
  %v549 = vpop.f32.mrb[0].mxu0
  %v550 = vpop.f32.mrb[0].mxu0
  %v551 = vadd.f32 %v454, %v550
  %v552 = vpop.f32.mrb[0].mxu0
  %553 = vmatprep.mubr.bf16.mxu0 0
  %554 = vmatmul.mubr.bf16.gmra.mrb[0].mxu0 %v204
  %v555 = vpop.f32.mrb[0].mxu0
  %v556 = vadd.f32 %v459, %v555
  %v557 = vpop.f32.mrb[0].mxu0
  %v558 = vpop.f32.mrb[0].mxu0
  %v559 = vadd.f32 %v462, %v558
  %v560 = vpop.f32.mrb[0].mxu0
  %561 = vmatprep.mubr.bf16.mxu0 0
  %562 = vmatmul.mubr.bf16.gmra.mrb[0].mxu0 %v207
  %v563 = vpop.f32.mrb[0].mxu0
  %v564 = vadd.f32 %v467, %v563
  %v565 = vpop.f32.mrb[0].mxu0
  %v566 = vpop.f32.mrb[0].mxu0
  %v567 = vadd.f32 %v470, %v566
  %v568 = vpop.f32.mrb[0].mxu0
  %569 = vdwg.mxu0
  %v570 = vpack.c.bf16 %v511, %v508
  %v571 = vpack.c.bf16 %v519, %v516
  %v572 = vpack.c.bf16 %v527, %v524
  %v573 = vpack.c.bf16 %v535, %v532
  %v574 = vpack.c.bf16 %v543, %v540
  %v575 = vpack.c.bf16 %v551, %v548
  %v576 = vpack.c.bf16 %v559, %v556
  %v577 = vpack.c.bf16 %v567, %v564
  %v586 = vunpack.c.l.b16 %v570
  %v587 = vunpack.c.h.b16 %v570
  %v588 = vunpack.c.l.b16 %v571
  %v589 = vunpack.c.h.b16 %v571
  %v590 = vunpack.c.l.b16 %v572
  %v591 = vunpack.c.h.b16 %v572
  %v592 = vunpack.c.l.b16 %v573
  %v593 = vunpack.c.h.b16 %v573
  %v594 = vunpack.c.l.b16 %v574
  %v595 = vunpack.c.h.b16 %v574
  %v596 = vunpack.c.l.b16 %v575
  %v597 = vunpack.c.h.b16 %v575
  %v598 = vunpack.c.l.b16 %v576
  %v599 = vunpack.c.h.b16 %v576
  %v600 = vunpack.c.l.b16 %v577
  %v601 = vunpack.c.h.b16 %v577
  %v602 = vpack.c.b16 %v586, %v586
  %v603 = vpack.c.b16 %v587, %v587
  %v604 = vpack.c.b16 %v588, %v588
  %v605 = vpack.c.b16 %v589, %v589
  %v606 = vpack.c.b16 %v590, %v590
  %v607 = vpack.c.b16 %v591, %v591
  %v608 = vpack.c.b16 %v592, %v592
  %v609 = vpack.c.b16 %v593, %v593
  %v610 = vpack.c.b16 %v594, %v594
  %v611 = vpack.c.b16 %v595, %v595
  %v612 = vpack.c.b16 %v596, %v596
  %v613 = vpack.c.b16 %v597, %v597
  %v614 = vpack.c.b16 %v598, %v598
  %v615 = vpack.c.b16 %v599, %v599
  %v616 = vpack.c.b16 %v600, %v600
  %v617 = vpack.c.b16 %v601, %v601
  %634 = vst [vmem:[%s3] sm:$0xf] %v602
  %635 = vst [vmem:[%s3 + $0x4] sm:$0xf] %v603
  %636 = vst [vmem:[%s3 + $0x8] sm:$0xf] %v604
  %637 = vst [vmem:[%s3 + $0xc] sm:$0xf] %v605
  %638 = vst [vmem:[%s3 + $0x10] sm:$0xf] %v606
  %639 = vst [vmem:[%s3 + $0x14] sm:$0xf] %v607
  %640 = vst [vmem:[%s3 + $0x18] sm:$0xf] %v608
  %641 = vst [vmem:[%s3 + $0x1c] sm:$0xf] %v609
  %642 = vst [vmem:[%s3 + $0x20] sm:$0xf] %v610
  %643 = vst [vmem:[%s3 + $0x24] sm:$0xf] %v611
  %644 = vst [vmem:[%s3 + $0x28] sm:$0xf] %v612
  %645 = vst [vmem:[%s3 + $0x2c] sm:$0xf] %v613
  %646 = vst [vmem:[%s3 + $0x30] sm:$0xf] %v614
  %647 = vst [vmem:[%s3 + $0x34] sm:$0xf] %v615
  %648 = vst [vmem:[%s3 + $0x38] sm:$0xf] %v616
  %649 = vst [vmem:[%s3 + $0x3c] sm:$0xf] %v617
  %v650 = vadd.f32 %v508, %v511
  %v651 = vadd.f32 %v650, %v516
  %v652 = vadd.f32 %v651, %v519
  %v653 = vadd.f32 %v652, %v524
  %v654 = vadd.f32 %v653, %v527
  %v655 = vadd.f32 %v654, %v532
  %v656 = vadd.f32 %v655, %v535
  %v657 = vadd.f32 %v656, %v540
  %v658 = vadd.f32 %v657, %v543
  %v659 = vadd.f32 %v658, %v548
  %v660 = vadd.f32 %v659, %v551
  %v661 = vadd.f32 %v660, %v556
  %v662 = vadd.f32 %v661, %v559
  %v663 = vadd.f32 %v662, %v564
  %v664 = vadd.f32 %v663, %v567
  %v665 = vrot.slane %v664, 4
  %v666 = vadd.f32 %v664, %v665
  %v667 = vrot.slane %v666, 2
  %v668 = vadd.f32 %v666, %v667
  %v669 = vrot.slane %v668, 1
  %v670 = vadd.f32 %v668, %v669
  %v671 = vmul.f32 %v508, %v508
  %v672 = vmul.f32 %v511, %v511
  %v673 = vmul.f32 %v516, %v516
  %v674 = vmul.f32 %v519, %v519
  %v675 = vmul.f32 %v524, %v524
  %v676 = vmul.f32 %v527, %v527
  %v677 = vmul.f32 %v532, %v532
  %v678 = vmul.f32 %v535, %v535
  %v679 = vmul.f32 %v540, %v540
  %v680 = vmul.f32 %v543, %v543
  %v681 = vmul.f32 %v548, %v548
  %v682 = vmul.f32 %v551, %v551
  %v683 = vmul.f32 %v556, %v556
  %v684 = vmul.f32 %v559, %v559
  %v685 = vmul.f32 %v564, %v564
  %v686 = vmul.f32 %v567, %v567
  %v687 = vadd.f32 %v671, %v672
  %v688 = vadd.f32 %v687, %v673
  %v689 = vadd.f32 %v688, %v674
  %v690 = vadd.f32 %v689, %v675
  %v691 = vadd.f32 %v690, %v676
  %v692 = vadd.f32 %v691, %v677
  %v693 = vadd.f32 %v692, %v678
  %v694 = vadd.f32 %v693, %v679
  %v695 = vadd.f32 %v694, %v680
  %v696 = vadd.f32 %v695, %v681
  %v697 = vadd.f32 %v696, %v682
  %v698 = vadd.f32 %v697, %v683
  %v699 = vadd.f32 %v698, %v684
  %v700 = vadd.f32 %v699, %v685
  %v701 = vadd.f32 %v700, %v686
  %v702 = vrot.slane %v701, 4
  %v703 = vadd.f32 %v701, %v702
  %v704 = vrot.slane %v703, 2
  %v705 = vadd.f32 %v703, %v704
  %v706 = vrot.slane %v705, 1
  %v707 = vadd.f32 %v705, %v706
  %708 = vst [vmem:[%s4] sm:$0x1] %v670
  %709 = vst [vmem:[%s4 + $0x1] sm:$0x1] %v707
  %710 = vst [vmem:[%s4 + $0x2] sm:$0x3f] 0.0
  // Predicated region
  $region14: #{resblock_forward.7} parent=0 // pred_check
    _
  $region15: #{resblock_forward.7} parent=0 // pred_check_branch
    %712 = sbr.rel (0) target = $region17
  $region16: #{resblock_forward.7} parent=0 // pred_region
    _
  $region17: #{resblock_forward.7} parent=0 // pred_fallthru
    _
  // Predicated region
  $region18: #{resblock_forward.7} parent=0 // pred_check
    _
  $region19: #{resblock_forward.7} parent=0 // pred_check_branch
    %714 = sbr.rel (0) target = $region21
  $region20: #{resblock_forward.7} parent=0 // pred_region
    _
  $region21: #{resblock_forward.7} parent=0 // pred_fallthru
    _
  // Predicated region
  $region22: #{resblock_forward.7} parent=0 // pred_check
    _
  $region23: #{resblock_forward.7} parent=0 // pred_check_branch
    %716 = sbr.rel (0) target = $region25
  $region24: #{resblock_forward.7} parent=0 // pred_region
    _
  $region25: #{resblock_forward.7} parent=0 // pred_fallthru
    _
  // Predicated region
  $region26: #{resblock_forward.7} parent=0 // pred_check
    _
  $region27: #{resblock_forward.7} parent=0 // pred_check_branch
    %718 = sbr.rel (0) target = $region29
  $region28: #{resblock_forward.7} parent=0 // pred_region
    _
  $region29: #{resblock_forward.7} parent=0 // pred_fallthru
    _

// kernel: resblock_forward.8
$region0: #{resblock_forward.8}
  #allocation0 [shape = 'u32[]', space=smem, size = 0x4, offset = 0x4, fixed_abs, tag = 'smem constant byte address 0x4 - core index']
  #allocation1 [shape = 'u32[144,128]{1,0:T(1,128)}', space=vmem, size = 0x12000, scoped, tag = 'internal scratch']
  %s0 = inlined_call_operand.vmem [shape: bf16[128,128], index: 0, kind: input, shape index: {}]
  %s1 = inlined_call_operand.vmem [shape: bf16[128,128], index: 1, kind: input, shape index: {}]
  %s2 = inlined_call_operand.vmem [shape: f32[1,128], index: 2, kind: input, shape index: {}]
  %s3 = inlined_call_operand.vmem [shape: bf16[128,128], index: 3, kind: output, shape index: {0}]
  %s4 = inlined_call_operand.vmem [shape: f32[8,128], index: 4, kind: output, shape index: {1}]
  %5 = xla_tuple %s3, %s4
  %s6 = sld [smem:[#allocation0]]
  $region30: #{resblock_forward.8} parent=0
    _
  %s8 = ssub.s32 1, %s6
  %s9 = scalar_select 0, %s8, %s6
  // Predicated region
  $region2: #{resblock_forward.8} parent=0 // pred_check
    _
  $region3: #{resblock_forward.8} parent=0 // pred_check_branch
    %11 = sbr.rel (0) target = $region5
  $region4: #{resblock_forward.8} parent=0 // pred_region
    _
  $region5: #{resblock_forward.8} parent=0 // pred_fallthru
    _
  // Predicated region
  $region6: #{resblock_forward.8} parent=0 // pred_check
    _
  $region7: #{resblock_forward.8} parent=0 // pred_check_branch
    %13 = sbr.rel (0) target = $region9
  $region8: #{resblock_forward.8} parent=0 // pred_region
    _
  $region9: #{resblock_forward.8} parent=0 // pred_fallthru
    _
  // Predicated region
  $region10: #{resblock_forward.8} parent=0 // pred_check
    _
  $region11: #{resblock_forward.8} parent=0 // pred_check_branch
    %15 = sbr.rel (0) target = $region13
  $region12: #{resblock_forward.8} parent=0 // pred_region
    _
  $region13: #{resblock_forward.8} parent=0 // pred_fallthru
    _
  %v17 = vld [vmem:[%s0] sm:$0xf]
  %v18 = vld [vmem:[%s0 + $0x4] sm:$0xf]
  %v19 = vld [vmem:[%s0 + $0x8] sm:$0xf]
  %v20 = vld [vmem:[%s0 + $0xc] sm:$0xf]
  %v21 = vld [vmem:[%s0 + $0x10] sm:$0xf]
  %v22 = vld [vmem:[%s0 + $0x14] sm:$0xf]
  %v23 = vld [vmem:[%s0 + $0x18] sm:$0xf]
  %v24 = vld [vmem:[%s0 + $0x1c] sm:$0xf]
  %v25 = vld [vmem:[%s0 + $0x20] sm:$0xf]
  %v26 = vld [vmem:[%s0 + $0x24] sm:$0xf]
  %v27 = vld [vmem:[%s0 + $0x28] sm:$0xf]
  %v28 = vld [vmem:[%s0 + $0x2c] sm:$0xf]
  %v29 = vld [vmem:[%s0 + $0x30] sm:$0xf]
  %v30 = vld [vmem:[%s0 + $0x34] sm:$0xf]
  %v31 = vld [vmem:[%s0 + $0x38] sm:$0xf]
  %v32 = vld [vmem:[%s0 + $0x3c] sm:$0xf]
  %v33 = vld [vmem:[%s1] sm:$0xf]
  %v34 = vld [vmem:[%s1 + $0x4] sm:$0xf]
  %v35 = vld [vmem:[%s1 + $0x8] sm:$0xf]
  %v36 = vld [vmem:[%s1 + $0xc] sm:$0xf]
  %v37 = vld [vmem:[%s1 + $0x10] sm:$0xf]
  %v38 = vld [vmem:[%s1 + $0x14] sm:$0xf]
  %v39 = vld [vmem:[%s1 + $0x18] sm:$0xf]
  %v40 = vld [vmem:[%s1 + $0x1c] sm:$0xf]
  %v41 = vld [vmem:[%s1 + $0x20] sm:$0xf]
  %v42 = vld [vmem:[%s1 + $0x24] sm:$0xf]
  %v43 = vld [vmem:[%s1 + $0x28] sm:$0xf]
  %v44 = vld [vmem:[%s1 + $0x2c] sm:$0xf]
  %v45 = vld [vmem:[%s1 + $0x30] sm:$0xf]
  %v46 = vld [vmem:[%s1 + $0x34] sm:$0xf]
  %v47 = vld [vmem:[%s1 + $0x38] sm:$0xf]
  %v48 = vld [vmem:[%s1 + $0x3c] sm:$0xf]
  %v49 = vld [vmem:[%s2] sm:$0x1]
  %v51 = vlaneseq
  %v52 = vshrl.u32 %v51, 7
  %v53 = vsub.s32 0, %v52
  %v54 = vrot.slane %v49, %v53
  %v72 = vunpack.c.l.b16 %v17
  %v73 = vunpack.c.l.b16 %v18
  %v74 = vunpack.c.l.b16 %v19
  %v75 = vunpack.c.l.b16 %v20
  %v76 = vunpack.c.l.b16 %v21
  %v77 = vunpack.c.l.b16 %v22
  %v78 = vunpack.c.l.b16 %v23
  %v79 = vunpack.c.l.b16 %v24
  %v80 = vunpack.c.l.b16 %v25
  %v81 = vunpack.c.l.b16 %v26
  %v82 = vunpack.c.l.b16 %v27
  %v83 = vunpack.c.l.b16 %v28
  %v84 = vunpack.c.l.b16 %v29
  %v85 = vunpack.c.l.b16 %v30
  %v86 = vunpack.c.l.b16 %v31
  %v87 = vunpack.c.l.b16 %v32
  %v88 = vpack.c.b16 %v73, %v72
  %v89 = vpack.c.b16 %v75, %v74
  %v90 = vpack.c.b16 %v77, %v76
  %v91 = vpack.c.b16 %v79, %v78
  %v92 = vpack.c.b16 %v81, %v80
  %v93 = vpack.c.b16 %v83, %v82
  %v94 = vpack.c.b16 %v85, %v84
  %v95 = vpack.c.b16 %v87, %v86
  %v120 = vunpack.c.l.b16 %v33
  %v121 = vunpack.c.l.b16 %v34
  %v122 = vunpack.c.l.b16 %v35
  %v123 = vunpack.c.l.b16 %v36
  %v124 = vunpack.c.l.b16 %v37
  %v125 = vunpack.c.l.b16 %v38
  %v126 = vunpack.c.l.b16 %v39
  %v127 = vunpack.c.l.b16 %v40
  %v128 = vunpack.c.l.b16 %v41
  %v129 = vunpack.c.l.b16 %v42
  %v130 = vunpack.c.l.b16 %v43
  %v131 = vunpack.c.l.b16 %v44
  %v132 = vunpack.c.l.b16 %v45
  %v133 = vunpack.c.l.b16 %v46
  %v134 = vunpack.c.l.b16 %v47
  %v135 = vunpack.c.l.b16 %v48
  %v136 = vpack.c.b16 %v121, %v120
  %v137 = vpack.c.b16 %v123, %v122
  %v138 = vpack.c.b16 %v125, %v124
  %v139 = vpack.c.b16 %v127, %v126
  %v140 = vpack.c.b16 %v129, %v128
  %v141 = vpack.c.b16 %v131, %v130
  %v142 = vpack.c.b16 %v133, %v132
  %v143 = vpack.c.b16 %v135, %v134
  %152 = vmatprep.subr.bf16.mxu0 0
  %153 = vmatpush1.bf16.msra.mxu0 %v136
  %154 = vmatprep.subr.bf16.mxu0 0
  %155 = vmatpush1.bf16.msra.mxu0 %v137
  %156 = vmatprep.subr.bf16.mxu0 0
  %157 = vmatpush1.bf16.msra.mxu0 %v138
  %158 = vmatprep.subr.bf16.mxu0 0
  %159 = vmatpush1.bf16.msra.mxu0 %v139
  %160 = vmatprep.subr.bf16.mxu0 0
  %161 = vmatpush1.bf16.msra.mxu0 %v140
  %162 = vmatprep.subr.bf16.mxu0 0
  %163 = vmatpush1.bf16.msra.mxu0 %v141
  %164 = vmatprep.subr.bf16.mxu0 0
  %165 = vmatpush1.bf16.msra.mxu0 %v142
  %166 = vmatprep.subr.bf16.mxu0 0
  %167 = vmatpush1.bf16.msra.mxu0 %v143
  %168 = vmatprep.subr.bf16.mxu0 0
  %169 = vmatpush1.bf16.msra.mxu0 0
  %170 = vmatprep.subr.bf16.mxu0 0
  %171 = vmatpush1.bf16.msra.mxu0 0
  %172 = vmatprep.subr.bf16.mxu0 0
  %173 = vmatpush1.bf16.msra.mxu0 0
  %174 = vmatprep.subr.bf16.mxu0 0
  %175 = vmatpush1.bf16.msra.mxu0 0
  %176 = vmatprep.subr.bf16.mxu0 0
  %177 = vmatpush1.bf16.msra.mxu0 0
  %178 = vmatprep.subr.bf16.mxu0 0
  %179 = vmatpush1.bf16.msra.mxu0 0
  %180 = vmatprep.subr.bf16.mxu0 0
  %181 = vmatpush1.bf16.msra.mxu0 0
  %182 = vmatprep.subr.bf16.mxu0 0
  %183 = vmatpush1.bf16.msra.mxu0 0
  %184 = vmatprep.mubr.bf16.mxu0 0
  %185 = vmatmul.mubr.bf16.gmra.mrb[0].mxu0 %v88
  %v186 = vpop.f32.mrb[0].mxu0
  %v187 = vadd.f32 %v54, %v186
  %v188 = vpop.f32.mrb[0].mxu0
  %v189 = vpop.f32.mrb[0].mxu0
  %v190 = vadd.f32 %v54, %v189
  %v191 = vpop.f32.mrb[0].mxu0
  %192 = vmatprep.mubr.bf16.mxu0 0
  %193 = vmatmul.mubr.bf16.gmra.mrb[0].mxu0 %v89
  %v194 = vpop.f32.mrb[0].mxu0
  %v195 = vadd.f32 %v54, %v194
  %v196 = vpop.f32.mrb[0].mxu0
  %v197 = vpop.f32.mrb[0].mxu0
  %v198 = vadd.f32 %v54, %v197
  %v199 = vpop.f32.mrb[0].mxu0
  %200 = vmatprep.mubr.bf16.mxu0 0
  %201 = vmatmul.mubr.bf16.gmra.mrb[0].mxu0 %v90
  %v202 = vpop.f32.mrb[0].mxu0
  %v203 = vadd.f32 %v54, %v202
  %v204 = vpop.f32.mrb[0].mxu0
  %v205 = vpop.f32.mrb[0].mxu0
  %v206 = vadd.f32 %v54, %v205
  %v207 = vpop.f32.mrb[0].mxu0
  %208 = vmatprep.mubr.bf16.mxu0 0
  %209 = vmatmul.mubr.bf16.gmra.mrb[0].mxu0 %v91
  %v210 = vpop.f32.mrb[0].mxu0
  %v211 = vadd.f32 %v54, %v210
  %v212 = vpop.f32.mrb[0].mxu0
  %v213 = vpop.f32.mrb[0].mxu0
  %v214 = vadd.f32 %v54, %v213
  %v215 = vpop.f32.mrb[0].mxu0
  %216 = vmatprep.mubr.bf16.mxu0 0
  %217 = vmatmul.mubr.bf16.gmra.mrb[0].mxu0 %v92
  %v218 = vpop.f32.mrb[0].mxu0
  %v219 = vadd.f32 %v54, %v218
  %v220 = vpop.f32.mrb[0].mxu0
  %v221 = vpop.f32.mrb[0].mxu0
  %v222 = vadd.f32 %v54, %v221
  %v223 = vpop.f32.mrb[0].mxu0
  %224 = vmatprep.mubr.bf16.mxu0 0
  %225 = vmatmul.mubr.bf16.gmra.mrb[0].mxu0 %v93
  %v226 = vpop.f32.mrb[0].mxu0
  %v227 = vadd.f32 %v54, %v226
  %v228 = vpop.f32.mrb[0].mxu0
  %v229 = vpop.f32.mrb[0].mxu0
  %v230 = vadd.f32 %v54, %v229
  %v231 = vpop.f32.mrb[0].mxu0
  %232 = vmatprep.mubr.bf16.mxu0 0
  %233 = vmatmul.mubr.bf16.gmra.mrb[0].mxu0 %v94
  %v234 = vpop.f32.mrb[0].mxu0
  %v235 = vadd.f32 %v54, %v234
  %v236 = vpop.f32.mrb[0].mxu0
  %v237 = vpop.f32.mrb[0].mxu0
  %v238 = vadd.f32 %v54, %v237
  %v239 = vpop.f32.mrb[0].mxu0
  %240 = vmatprep.mubr.bf16.mxu0 0
  %241 = vmatmul.mubr.bf16.gmra.mrb[0].mxu0 %v95
  %v242 = vpop.f32.mrb[0].mxu0
  %v243 = vadd.f32 %v54, %v242
  %v244 = vpop.f32.mrb[0].mxu0
  %v245 = vpop.f32.mrb[0].mxu0
  %v246 = vadd.f32 %v54, %v245
  %v247 = vpop.f32.mrb[0].mxu0
  %248 = vdwg.mxu0
  %v249 = vpack.c.bf16 %v190, %v187
  %v250 = vpack.c.bf16 %v198, %v195
  %v251 = vpack.c.bf16 %v206, %v203
  %v252 = vpack.c.bf16 %v214, %v211
  %v253 = vpack.c.bf16 %v222, %v219
  %v254 = vpack.c.bf16 %v230, %v227
  %v255 = vpack.c.bf16 %v238, %v235
  %v256 = vpack.c.bf16 %v246, %v243
  %v265 = vunpack.c.l.b16 %v249
  %v266 = vunpack.c.h.b16 %v249
  %v267 = vunpack.c.l.b16 %v250
  %v268 = vunpack.c.h.b16 %v250
  %v269 = vunpack.c.l.b16 %v251
  %v270 = vunpack.c.h.b16 %v251
  %v271 = vunpack.c.l.b16 %v252
  %v272 = vunpack.c.h.b16 %v252
  %v273 = vunpack.c.l.b16 %v253
  %v274 = vunpack.c.h.b16 %v253
  %v275 = vunpack.c.l.b16 %v254
  %v276 = vunpack.c.h.b16 %v254
  %v277 = vunpack.c.l.b16 %v255
  %v278 = vunpack.c.h.b16 %v255
  %v279 = vunpack.c.l.b16 %v256
  %v280 = vunpack.c.h.b16 %v256
  %v281 = vpack.c.b16 %v265, %v265
  %v282 = vpack.c.b16 %v266, %v266
  %v283 = vpack.c.b16 %v267, %v267
  %v284 = vpack.c.b16 %v268, %v268
  %v285 = vpack.c.b16 %v269, %v269
  %v286 = vpack.c.b16 %v270, %v270
  %v287 = vpack.c.b16 %v271, %v271
  %v288 = vpack.c.b16 %v272, %v272
  %v289 = vpack.c.b16 %v273, %v273
  %v290 = vpack.c.b16 %v274, %v274
  %v291 = vpack.c.b16 %v275, %v275
  %v292 = vpack.c.b16 %v276, %v276
  %v293 = vpack.c.b16 %v277, %v277
  %v294 = vpack.c.b16 %v278, %v278
  %v295 = vpack.c.b16 %v279, %v279
  %v296 = vpack.c.b16 %v280, %v280
  %313 = vst [vmem:[%s3] sm:$0xf] %v281
  %314 = vst [vmem:[%s3 + $0x4] sm:$0xf] %v282
  %315 = vst [vmem:[%s3 + $0x8] sm:$0xf] %v283
  %316 = vst [vmem:[%s3 + $0xc] sm:$0xf] %v284
  %317 = vst [vmem:[%s3 + $0x10] sm:$0xf] %v285
  %318 = vst [vmem:[%s3 + $0x14] sm:$0xf] %v286
  %319 = vst [vmem:[%s3 + $0x18] sm:$0xf] %v287
  %320 = vst [vmem:[%s3 + $0x1c] sm:$0xf] %v288
  %321 = vst [vmem:[%s3 + $0x20] sm:$0xf] %v289
  %322 = vst [vmem:[%s3 + $0x24] sm:$0xf] %v290
  %323 = vst [vmem:[%s3 + $0x28] sm:$0xf] %v291
  %324 = vst [vmem:[%s3 + $0x2c] sm:$0xf] %v292
  %325 = vst [vmem:[%s3 + $0x30] sm:$0xf] %v293
  %326 = vst [vmem:[%s3 + $0x34] sm:$0xf] %v294
  %327 = vst [vmem:[%s3 + $0x38] sm:$0xf] %v295
  %328 = vst [vmem:[%s3 + $0x3c] sm:$0xf] %v296
  %v329 = vadd.f32 %v187, %v190
  %v330 = vadd.f32 %v329, %v195
  %v331 = vadd.f32 %v330, %v198
  %v332 = vadd.f32 %v331, %v203
  %v333 = vadd.f32 %v332, %v206
  %v334 = vadd.f32 %v333, %v211
  %v335 = vadd.f32 %v334, %v214
  %v336 = vadd.f32 %v335, %v219
  %v337 = vadd.f32 %v336, %v222
  %v338 = vadd.f32 %v337, %v227
  %v339 = vadd.f32 %v338, %v230
  %v340 = vadd.f32 %v339, %v235
  %v341 = vadd.f32 %v340, %v238
  %v342 = vadd.f32 %v341, %v243
  %v343 = vadd.f32 %v342, %v246
  %v344 = vrot.slane %v343, 4
  %v345 = vadd.f32 %v343, %v344
  %v346 = vrot.slane %v345, 2
  %v347 = vadd.f32 %v345, %v346
  %v348 = vrot.slane %v347, 1
  %v349 = vadd.f32 %v347, %v348
  %v350 = vmul.f32 %v187, %v187
  %v351 = vmul.f32 %v190, %v190
  %v352 = vmul.f32 %v195, %v195
  %v353 = vmul.f32 %v198, %v198
  %v354 = vmul.f32 %v203, %v203
  %v355 = vmul.f32 %v206, %v206
  %v356 = vmul.f32 %v211, %v211
  %v357 = vmul.f32 %v214, %v214
  %v358 = vmul.f32 %v219, %v219
  %v359 = vmul.f32 %v222, %v222
  %v360 = vmul.f32 %v227, %v227
  %v361 = vmul.f32 %v230, %v230
  %v362 = vmul.f32 %v235, %v235
  %v363 = vmul.f32 %v238, %v238
  %v364 = vmul.f32 %v243, %v243
  %v365 = vmul.f32 %v246, %v246
  %v366 = vadd.f32 %v350, %v351
  %v367 = vadd.f32 %v366, %v352
  %v368 = vadd.f32 %v367, %v353
  %v369 = vadd.f32 %v368, %v354
  %v370 = vadd.f32 %v369, %v355
  %v371 = vadd.f32 %v370, %v356
  %v372 = vadd.f32 %v371, %v357
  %v373 = vadd.f32 %v372, %v358
  %v374 = vadd.f32 %v373, %v359
  %v375 = vadd.f32 %v374, %v360
  %v376 = vadd.f32 %v375, %v361
  %v377 = vadd.f32 %v376, %v362
  %v378 = vadd.f32 %v377, %v363
  %v379 = vadd.f32 %v378, %v364
  %v380 = vadd.f32 %v379, %v365
  %v381 = vrot.slane %v380, 4
  %v382 = vadd.f32 %v380, %v381
  %v383 = vrot.slane %v382, 2
  %v384 = vadd.f32 %v382, %v383
  %v385 = vrot.slane %v384, 1
  %v386 = vadd.f32 %v384, %v385
  %387 = vst [vmem:[%s4] sm:$0x1] %v349
  %388 = vst [vmem:[%s4 + $0x1] sm:$0x1] %v386
  %389 = vst [vmem:[%s4 + $0x2] sm:$0x3f] 0.0
  // Predicated region
  $region14: #{resblock_forward.8} parent=0 // pred_check
    _
  $region15: #{resblock_forward.8} parent=0 // pred_check_branch
    %391 = sbr.rel (0) target = $region17
  $region16: #{resblock_forward.8} parent=0 // pred_region
    _
  $region17: #{resblock_forward.8} parent=0 // pred_fallthru
    _
  // Predicated region
  $region18: #{resblock_forward.8} parent=0 // pred_check
    _
  $region19: #{resblock_forward.8} parent=0 // pred_check_branch
    %393 = sbr.rel (0) target = $region21
  $region20: #{resblock_forward.8} parent=0 // pred_region
    _
  $region21: #{resblock_forward.8} parent=0 // pred_fallthru
    _
  // Predicated region
  $region22: #{resblock_forward.8} parent=0 // pred_check
    _
  $region23: #{resblock_forward.8} parent=0 // pred_check_branch
    %395 = sbr.rel (0) target = $region25
  $region24: #{resblock_forward.8} parent=0 // pred_region
    _
  $region25: #{resblock_forward.8} parent=0 // pred_fallthru
    _
  // Predicated region
  $region26: #{resblock_forward.8} parent=0 // pred_check
    _
  $region27: #{resblock_forward.8} parent=0 // pred_check_branch
    %397 = sbr.rel (0) target = $region29
  $region28: #{resblock_forward.8} parent=0 // pred_region
    _
  $region29: #{resblock_forward.8} parent=0 // pred_fallthru
    _

// kernel: resblock_forward.9
$region0: #{resblock_forward.9}
  #allocation0 [shape = 'u32[]', space=smem, size = 0x4, offset = 0x4, fixed_abs, tag = 'smem constant byte address 0x4 - core index']
  #allocation1 [shape = 'u32[144,128]{1,0:T(1,128)}', space=vmem, size = 0x12000, scoped, tag = 'internal scratch']
  %s0 = inlined_call_operand.vmem [shape: f32[8,128], index: 0, kind: input, shape index: {}]
  %s1 = inlined_call_operand.vmem [shape: f32[1,128], index: 1, kind: input, shape index: {}, may-alias: {1,4}]
  %s2 = inlined_call_operand.vmem [shape: f32[1,128], index: 2, kind: input, shape index: {}, may-alias: {2,5}]
  %s3 = inlined_call_operand.vmem [shape: f32[8,128], index: 3, kind: input, shape index: {}]
  %s4 = inlined_call_operand.vmem [shape: f32[1,128], index: 4, kind: input, shape index: {}, may-alias: {1,4}]
  %s5 = inlined_call_operand.vmem [shape: f32[1,128], index: 5, kind: input, shape index: {}, may-alias: {2,5}]
  %s6 = inlined_call_operand.vmem [shape: bf16[128,128], index: 6, kind: input, shape index: {}]
  %s7 = inlined_call_operand.vmem [shape: bf16[128,128], index: 7, kind: input, shape index: {}]
  %s8 = inlined_call_operand.hbm [shape: f32[128,128], index: 8, kind: output, shape index: {}]
  %s9 = sld [smem:[#allocation0]]
  $region42: #{resblock_forward.9} parent=0
    _
  %s11 = ssub.s32 1, %s9
  %s12 = scalar_select 0, %s11, %s9
  $region1: #{resblock_forward.9} parent=0
    #allocation2 [shape = 'u8[65536]{0}', space=vmem, size = 0x10000, scoped, tag = 'output window, operand 0, single buffered']
    #allocation3 [shape = 's32[1]{0}', space=sflag, size = 0x4, scoped, tag = 'scoped memory for resblock_forward.9']
    %13 = vsyncpa [#allocation3], 0
    // Predicated region
    $region2: #{resblock_forward.9} parent=1 // pred_check
      _
    $region3: #{resblock_forward.9} parent=1 // pred_check_branch
      %15 = sbr.rel (0) target = $region5
    $region4: #{resblock_forward.9} parent=1 // pred_region
      _
    $region5: #{resblock_forward.9} parent=1 // pred_fallthru
      _
    // Predicated region
    $region6: #{resblock_forward.9} parent=1 // pred_check
      _
    $region7: #{resblock_forward.9} parent=1 // pred_check_branch
      %17 = sbr.rel (0) target = $region9
    $region8: #{resblock_forward.9} parent=1 // pred_region
      _
    $region9: #{resblock_forward.9} parent=1 // pred_fallthru
      _
    // Predicated region
    $region10: #{resblock_forward.9} parent=1 // pred_check
      _
    $region11: #{resblock_forward.9} parent=1 // pred_check_branch
      %19 = sbr.rel (0) target = $region13
    $region12: #{resblock_forward.9} parent=1 // pred_region
      _
    $region13: #{resblock_forward.9} parent=1 // pred_fallthru
      _
    // Predicated region
    $region14: #{resblock_forward.9} parent=1 // pred_check
      _
    $region15: #{resblock_forward.9} parent=1 // pred_check_branch
      %21 = sbr.rel (0) target = $region17
    $region16: #{resblock_forward.9} parent=1 // pred_region
      _
    $region17: #{resblock_forward.9} parent=1 // pred_fallthru
      _
    // Predicated region
    $region18: #{resblock_forward.9} parent=1 // pred_check
      _
    $region19: #{resblock_forward.9} parent=1 // pred_check_branch
      %23 = sbr.rel (0) target = $region21
    $region20: #{resblock_forward.9} parent=1 // pred_region
      _
    $region21: #{resblock_forward.9} parent=1 // pred_fallthru
      _
    // Predicated region
    $region22: #{resblock_forward.9} parent=1 // pred_check
      _
    $region23: #{resblock_forward.9} parent=1 // pred_check_branch
      %25 = sbr.rel (0) target = $region25
    $region24: #{resblock_forward.9} parent=1 // pred_region
      _
    $region25: #{resblock_forward.9} parent=1 // pred_fallthru
      _
    // Predicated region
    $region26: #{resblock_forward.9} parent=1 // pred_check
      _
    $region27: #{resblock_forward.9} parent=1 // pred_check_branch
      %27 = sbr.rel (0) target = $region29
    $region28: #{resblock_forward.9} parent=1 // pred_region
      _
    $region29: #{resblock_forward.9} parent=1 // pred_fallthru
      _
    // Predicated region
    $region30: #{resblock_forward.9} parent=1 // pred_check
      _
    $region31: #{resblock_forward.9} parent=1 // pred_check_branch
      %29 = sbr.rel (0) target = $region33
    $region32: #{resblock_forward.9} parent=1 // pred_region
      _
    $region33: #{resblock_forward.9} parent=1 // pred_fallthru
      _
    %v30 = vld [vmem:[%s0] sm:$0xff]
    %v31 = vld [vmem:[%s1] sm:$0x1]
    %v32 = vld [vmem:[%s2] sm:$0x1]
    %v33 = vmul.f32 %v30, 0.0078125
    %v34 = vmul.f32 %v33, %v33
    %v36 = vrot.slane %v34, 7
    %v38 = vsub.f32 %v33, %v36
    %v39 = vmax.f32 %v38, 0.0
    %v40 = vadd.f32 %v39, 1e-05
    %v41 = vrsqrt.pop %v40
    %v44 = vunpack.c.l.s4 1966171168
    %v45 = vunpack.c.0.s8 %v44
    %v46 = vlaneseq
    %v47 = vshrl.u32 %v46, 7
    %v48 = vsub.s32 %v45, %v47
    %v49 = vrot.slane %v41, %v48
    %v50 = vcombine.high %v49, %v49
    %v52 = vunpack.c.l.s4 1966171168
    %v53 = vunpack.c.0.s8 %v52
    %v54 = vlaneseq
    %v55 = vshrl.u32 %v54, 7
    %v56 = vsub.s32 %v53, %v55
    %v57 = vrot.slane %v50, %v56
    %v59 = vmul.f32 %v31, %v57
    %v60 = vmul.f32 %v33, %v59
    %v61 = vsub.f32 %v32, %v60
    %v62 = vld [vmem:[%s3] sm:$0xff]
    %v63 = vld [vmem:[%s4] sm:$0x1]
    %v64 = vld [vmem:[%s5] sm:$0x1]
    %v65 = vmul.f32 %v62, 0.0078125
    %v66 = vmul.f32 %v65, %v65
    %v68 = vrot.slane %v66, 7
    %v70 = vsub.f32 %v65, %v68
    %v71 = vmax.f32 %v70, 0.0
    %v72 = vadd.f32 %v71, 1e-05
    %v73 = vrsqrt.pop %v72
    %v76 = vunpack.c.l.s4 1966171168
    %v77 = vunpack.c.0.s8 %v76
    %v78 = vlaneseq
    %v79 = vshrl.u32 %v78, 7
    %v80 = vsub.s32 %v77, %v79
    %v81 = vrot.slane %v73, %v80
    %v82 = vcombine.high %v81, %v81
    %v84 = vunpack.c.l.s4 1966171168
    %v85 = vunpack.c.0.s8 %v84
    %v86 = vlaneseq
    %v87 = vshrl.u32 %v86, 7
    %v88 = vsub.s32 %v85, %v87
    %v89 = vrot.slane %v82, %v88
    %v91 = vmul.f32 %v63, %v89
    %v92 = vmul.f32 %v65, %v91
    %v93 = vsub.f32 %v64, %v92
    %v94 = vld [vmem:[%s6] sm:$0xf]
    %v95 = vld [vmem:[%s6 + $0x4] sm:$0xf]
    %v96 = vld [vmem:[%s6 + $0x8] sm:$0xf]
    %v97 = vld [vmem:[%s6 + $0xc] sm:$0xf]
    %v98 = vld [vmem:[%s6 + $0x10] sm:$0xf]
    %v99 = vld [vmem:[%s6 + $0x14] sm:$0xf]
    %v100 = vld [vmem:[%s6 + $0x18] sm:$0xf]
    %v101 = vld [vmem:[%s6 + $0x1c] sm:$0xf]
    %v102 = vld [vmem:[%s6 + $0x20] sm:$0xf]
    %v103 = vld [vmem:[%s6 + $0x24] sm:$0xf]
    %v104 = vld [vmem:[%s6 + $0x28] sm:$0xf]
    %v105 = vld [vmem:[%s6 + $0x2c] sm:$0xf]
    %v106 = vld [vmem:[%s6 + $0x30] sm:$0xf]
    %v107 = vld [vmem:[%s6 + $0x34] sm:$0xf]
    %v108 = vld [vmem:[%s6 + $0x38] sm:$0xf]
    %v109 = vld [vmem:[%s6 + $0x3c] sm:$0xf]
    %v110 = vunpack.c.l.bf16 %v94
    %v111 = vunpack.c.l.bf16 %v95
    %v112 = vunpack.c.l.bf16 %v96
    %v113 = vunpack.c.l.bf16 %v97
    %v114 = vunpack.c.l.bf16 %v98
    %v115 = vunpack.c.l.bf16 %v99
    %v116 = vunpack.c.l.bf16 %v100
    %v117 = vunpack.c.l.bf16 %v101
    %v118 = vunpack.c.l.bf16 %v102
    %v119 = vunpack.c.l.bf16 %v103
    %v120 = vunpack.c.l.bf16 %v104
    %v121 = vunpack.c.l.bf16 %v105
    %v122 = vunpack.c.l.bf16 %v106
    %v123 = vunpack.c.l.bf16 %v107
    %v124 = vunpack.c.l.bf16 %v108
    %v125 = vunpack.c.l.bf16 %v109
    %v127 = vlaneseq
    %v128 = vshrl.u32 %v127, 7
    %v129 = vsub.s32 0, %v128
    %v130 = vrot.slane %v59, %v129
    %v132 = vmul.f32 %v110, %v130
    %v133 = vmul.f32 %v111, %v130
    %v134 = vmul.f32 %v112, %v130
    %v135 = vmul.f32 %v113, %v130
    %v136 = vmul.f32 %v114, %v130
    %v137 = vmul.f32 %v115, %v130
    %v138 = vmul.f32 %v116, %v130
    %v139 = vmul.f32 %v117, %v130
    %v140 = vmul.f32 %v118, %v130
    %v141 = vmul.f32 %v119, %v130
    %v142 = vmul.f32 %v120, %v130
    %v143 = vmul.f32 %v121, %v130
    %v144 = vmul.f32 %v122, %v130
    %v145 = vmul.f32 %v123, %v130
    %v146 = vmul.f32 %v124, %v130
    %v147 = vmul.f32 %v125, %v130
    %v149 = vlaneseq
    %v150 = vshrl.u32 %v149, 7
    %v151 = vsub.s32 0, %v150
    %v152 = vrot.slane %v61, %v151
    %v154 = vadd.f32 %v132, %v152
    %v155 = vadd.f32 %v133, %v152
    %v156 = vadd.f32 %v134, %v152
    %v157 = vadd.f32 %v135, %v152
    %v158 = vadd.f32 %v136, %v152
    %v159 = vadd.f32 %v137, %v152
    %v160 = vadd.f32 %v138, %v152
    %v161 = vadd.f32 %v139, %v152
    %v162 = vadd.f32 %v140, %v152
    %v163 = vadd.f32 %v141, %v152
    %v164 = vadd.f32 %v142, %v152
    %v165 = vadd.f32 %v143, %v152
    %v166 = vadd.f32 %v144, %v152
    %v167 = vadd.f32 %v145, %v152
    %v168 = vadd.f32 %v146, %v152
    %v169 = vadd.f32 %v147, %v152
    %v170 = vmax.f32 %v154, 0.0
    %v171 = vmax.f32 %v155, 0.0
    %v172 = vmax.f32 %v156, 0.0
    %v173 = vmax.f32 %v157, 0.0
    %v174 = vmax.f32 %v158, 0.0
    %v175 = vmax.f32 %v159, 0.0
    %v176 = vmax.f32 %v160, 0.0
    %v177 = vmax.f32 %v161, 0.0
    %v178 = vmax.f32 %v162, 0.0
    %v179 = vmax.f32 %v163, 0.0
    %v180 = vmax.f32 %v164, 0.0
    %v181 = vmax.f32 %v165, 0.0
    %v182 = vmax.f32 %v166, 0.0
    %v183 = vmax.f32 %v167, 0.0
    %v184 = vmax.f32 %v168, 0.0
    %v185 = vmax.f32 %v169, 0.0
    %v186 = vld [vmem:[%s7] sm:$0xf]
    %v187 = vld [vmem:[%s7 + $0x4] sm:$0xf]
    %v188 = vld [vmem:[%s7 + $0x8] sm:$0xf]
    %v189 = vld [vmem:[%s7 + $0xc] sm:$0xf]
    %v190 = vld [vmem:[%s7 + $0x10] sm:$0xf]
    %v191 = vld [vmem:[%s7 + $0x14] sm:$0xf]
    %v192 = vld [vmem:[%s7 + $0x18] sm:$0xf]
    %v193 = vld [vmem:[%s7 + $0x1c] sm:$0xf]
    %v194 = vld [vmem:[%s7 + $0x20] sm:$0xf]
    %v195 = vld [vmem:[%s7 + $0x24] sm:$0xf]
    %v196 = vld [vmem:[%s7 + $0x28] sm:$0xf]
    %v197 = vld [vmem:[%s7 + $0x2c] sm:$0xf]
    %v198 = vld [vmem:[%s7 + $0x30] sm:$0xf]
    %v199 = vld [vmem:[%s7 + $0x34] sm:$0xf]
    %v200 = vld [vmem:[%s7 + $0x38] sm:$0xf]
    %v201 = vld [vmem:[%s7 + $0x3c] sm:$0xf]
    %v202 = vunpack.c.l.bf16 %v186
    %v203 = vunpack.c.l.bf16 %v187
    %v204 = vunpack.c.l.bf16 %v188
    %v205 = vunpack.c.l.bf16 %v189
    %v206 = vunpack.c.l.bf16 %v190
    %v207 = vunpack.c.l.bf16 %v191
    %v208 = vunpack.c.l.bf16 %v192
    %v209 = vunpack.c.l.bf16 %v193
    %v210 = vunpack.c.l.bf16 %v194
    %v211 = vunpack.c.l.bf16 %v195
    %v212 = vunpack.c.l.bf16 %v196
    %v213 = vunpack.c.l.bf16 %v197
    %v214 = vunpack.c.l.bf16 %v198
    %v215 = vunpack.c.l.bf16 %v199
    %v216 = vunpack.c.l.bf16 %v200
    %v217 = vunpack.c.l.bf16 %v201
    %v219 = vlaneseq
    %v220 = vshrl.u32 %v219, 7
    %v221 = vsub.s32 0, %v220
    %v222 = vrot.slane %v91, %v221
    %v224 = vmul.f32 %v202, %v222
    %v225 = vmul.f32 %v203, %v222
    %v226 = vmul.f32 %v204, %v222
    %v227 = vmul.f32 %v205, %v222
    %v228 = vmul.f32 %v206, %v222
    %v229 = vmul.f32 %v207, %v222
    %v230 = vmul.f32 %v208, %v222
    %v231 = vmul.f32 %v209, %v222
    %v232 = vmul.f32 %v210, %v222
    %v233 = vmul.f32 %v211, %v222
    %v234 = vmul.f32 %v212, %v222
    %v235 = vmul.f32 %v213, %v222
    %v236 = vmul.f32 %v214, %v222
    %v237 = vmul.f32 %v215, %v222
    %v238 = vmul.f32 %v216, %v222
    %v239 = vmul.f32 %v217, %v222
    %v241 = vlaneseq
    %v242 = vshrl.u32 %v241, 7
    %v243 = vsub.s32 0, %v242
    %v244 = vrot.slane %v93, %v243
    %v246 = vadd.f32 %v224, %v244
    %v247 = vadd.f32 %v225, %v244
    %v248 = vadd.f32 %v226, %v244
    %v249 = vadd.f32 %v227, %v244
    %v250 = vadd.f32 %v228, %v244
    %v251 = vadd.f32 %v229, %v244
    %v252 = vadd.f32 %v230, %v244
    %v253 = vadd.f32 %v231, %v244
    %v254 = vadd.f32 %v232, %v244
    %v255 = vadd.f32 %v233, %v244
    %v256 = vadd.f32 %v234, %v244
    %v257 = vadd.f32 %v235, %v244
    %v258 = vadd.f32 %v236, %v244
    %v259 = vadd.f32 %v237, %v244
    %v260 = vadd.f32 %v238, %v244
    %v261 = vadd.f32 %v239, %v244
    %v262 = vadd.f32 %v170, %v246
    %v263 = vadd.f32 %v171, %v247
    %v264 = vadd.f32 %v172, %v248
    %v265 = vadd.f32 %v173, %v249
    %v266 = vadd.f32 %v174, %v250
    %v267 = vadd.f32 %v175, %v251
    %v268 = vadd.f32 %v176, %v252
    %v269 = vadd.f32 %v177, %v253
    %v270 = vadd.f32 %v178, %v254
    %v271 = vadd.f32 %v179, %v255
    %v272 = vadd.f32 %v180, %v256
    %v273 = vadd.f32 %v181, %v257
    %v274 = vadd.f32 %v182, %v258
    %v275 = vadd.f32 %v183, %v259
    %v276 = vadd.f32 %v184, %v260
    %v277 = vadd.f32 %v185, %v261
    %v278 = vmax.f32 %v262, 0.0
    %v279 = vmax.f32 %v263, 0.0
    %v280 = vmax.f32 %v264, 0.0
    %v281 = vmax.f32 %v265, 0.0
    %v282 = vmax.f32 %v266, 0.0
    %v283 = vmax.f32 %v267, 0.0
    %v284 = vmax.f32 %v268, 0.0
    %v285 = vmax.f32 %v269, 0.0
    %v286 = vmax.f32 %v270, 0.0
    %v287 = vmax.f32 %v271, 0.0
    %v288 = vmax.f32 %v272, 0.0
    %v289 = vmax.f32 %v273, 0.0
    %v290 = vmax.f32 %v274, 0.0
    %v291 = vmax.f32 %v275, 0.0
    %v292 = vmax.f32 %v276, 0.0
    %v293 = vmax.f32 %v277, 0.0
    %294 = vst [vmem:[#allocation2] sm:$0xff] %v278
    %295 = vst [vmem:[#allocation2 + $0x8] sm:$0xff] %v279
    %296 = vst [vmem:[#allocation2 + $0x10] sm:$0xff] %v280
    %297 = vst [vmem:[#allocation2 + $0x18] sm:$0xff] %v281
    %298 = vst [vmem:[#allocation2 + $0x20] sm:$0xff] %v282
    %299 = vst [vmem:[#allocation2 + $0x28] sm:$0xff] %v283
    %300 = vst [vmem:[#allocation2 + $0x30] sm:$0xff] %v284
    %301 = vst [vmem:[#allocation2 + $0x38] sm:$0xff] %v285
    %302 = vst [vmem:[#allocation2 + $0x40] sm:$0xff] %v286
    %303 = vst [vmem:[#allocation2 + $0x48] sm:$0xff] %v287
    %304 = vst [vmem:[#allocation2 + $0x50] sm:$0xff] %v288
    %305 = vst [vmem:[#allocation2 + $0x58] sm:$0xff] %v289
    %306 = vst [vmem:[#allocation2 + $0x60] sm:$0xff] %v290
    %307 = vst [vmem:[#allocation2 + $0x68] sm:$0xff] %v291
    %308 = vst [vmem:[#allocation2 + $0x70] sm:$0xff] %v292
    %309 = vst [vmem:[#allocation2 + $0x78] sm:$0xff] %v293
    // Predicated region
    $region34: #{resblock_forward.9} parent=1 // pred_check
      _
    $region35: #{resblock_forward.9} parent=1 // pred_check_branch
      %311 = sbr.rel (0) target = $region37
    $region36: #{resblock_forward.9} parent=1 // pred_region
      %s313 = ssub.s32 2048, 2048
      %314 = vsyncadd [#allocation3], %s313
      %s315 = sshll.u32 [#allocation2], 4
      %s316 = int_to_ptr.vmem [resolvable:$true] %s315
      %321 = dma.vmem_to_hbm [thread:$0]  %s316, 2048, %s8, [#allocation3], 128, 128, 8
    $region37: #{resblock_forward.9} parent=1 // pred_fallthru
      _
    // Predicated region
    $region38: #{resblock_forward.9} parent=1 // pred_check
      _
    $region39: #{resblock_forward.9} parent=1 // pred_check_branch
      %323 = sbr.rel (0) target = $region41
    $region40: #{resblock_forward.9} parent=1 // pred_region
      %324 = dma.done [#allocation3], 2048
    $region41: #{resblock_forward.9} parent=1 // pred_fallthru
      _
    %325 = vsyncpa [#allocation3], 1

</llo_original>
